<compile_context>
chip_gen: v7x
topology: tpu7x:2x2x1
jax: 0.10.0
libtpu: 0.0.40
codegen_flags: <defaults>
</compile_context>

<pallas_src>
import jax
import jax.numpy as jnp
import numpy as np
from jax.experimental import pallas as pl
from jax.experimental.pallas import tpu as pltpu

EPS = 1e-5
NEG_SLOPE = 0.2
IO_DTYPE = jnp.bfloat16     # dtype of the HBM-round-tripped intermediates


# --------------------------------- helpers -----------------------------------

def _lrelu(y):
    return jnp.where(y > 0, y, NEG_SLOPE * y)


def _bn_affine(stat, gamma, beta, count):
    """Fold training-mode BN (batch mean, biased var) into per-channel scale/shift.
    stat: (C, 2) columns = [sum, sumsq].  O(C) wrapper glue.
    NOTE: one-pass sum/sumsq in f32 can cancel when |mean| >> std; fine for conv
    outputs of ~zero-mean inputs, switch to Welford-style partials otherwise."""
    mean = stat[:, 0] / count
    var = jnp.maximum(stat[:, 1] / count - mean * mean, 0.0)
    scale = gamma.astype(jnp.float32) * jax.lax.rsqrt(var + EPS)
    shift = beta.astype(jnp.float32) - mean * scale
    return jnp.stack([scale, shift], axis=-1)                 # (C, 2)


def _pick_batch_tile(n, bytes_per_sample, target_bytes=2 << 20, cap=8):
    """Largest divisor of n (<= cap) whose resident block bytes stay under the
    target -- bigger blocks amortize per-step pipeline overhead and DMA setup."""
    best = 1
    for d in range(1, min(n, cap) + 1):
        if n % d == 0 and d * bytes_per_sample <= target_bytes:
            best = d
    return best


def _vmem_limit(block_bytes):
    """Scoped-VMEM budget: double-buffered blocks + headroom, capped at 48 MiB so
    Mosaic keeps bookkeeping headroom below v7x's 64 MiB physical VMEM
    (could be raised toward ~100 MiB on v5e / v6e)."""
    need = 3 * block_bytes + (8 << 20)
    return int(min(max(need, 16 << 20), 48 << 20))


# --------------------------------- kernels ------------------------------------

def _k1_fused_conv_kernel(xe_ref, xo_ref, wcat_ref, y1_ref, sc_ref, st_ref):
    # xe_ref/xo_ref: (B_TILE, Cin, To+1) f32  even/odd phases of the padded input
    # wcat_ref:      (4, 2*Cout, Cin)    f32  tap-major fused [conv1 | shortcut] weights
    # y1_ref/sc_ref: (B_TILE, Cout, To)  bf16 raw conv outputs (time on lanes)
    # st_ref:        (1, 2*Cout, 2)      f32  per-batch-tile [sum, sumsq]
    bt, _, tp1 = xe_ref.shape
    to = tp1 - 1
    cout2 = wcat_ref.shape[1]
    cout = cout2 // 2

    st = jnp.zeros((cout2, 2), jnp.float32)
    for b in range(bt):                           # static unroll over the batch tile
        xe = xe_ref[b]                            # (Cin, To+1)
        xo = xo_ref[b]
        # stride-2 conv taps: x_pad[2t+k], k=0..3  ->  xe[t], xo[t], xe[t+1], xo[t+1]
        taps = (xe[:, 0:to], xo[:, 0:to], xe[:, 1:tp1], xo[:, 1:tp1])
        y = jnp.dot(wcat_ref[0], taps[0], preferred_element_type=jnp.float32)
        for k in range(1, 4):                     # accumulating dots, K = Cin each
            y = y + jnp.dot(wcat_ref[k], taps[k], preferred_element_type=jnp.float32)
        y1_ref[b] = y[:cout].astype(y1_ref.dtype)       # bf16 only for storage
        sc_ref[b] = y[cout:].astype(sc_ref.dtype)
        s = jnp.sum(y, axis=-1, keepdims=True)          # f32 stats BEFORE downcast
        ss = jnp.sum(y * y, axis=-1, keepdims=True)
        st = st + jnp.concatenate([s, ss], axis=-1)
    st_ref[...] = st[None]


def _k2_conv2_kernel(y1_ref, aff1_ref, w2_ref, y2_ref, st_ref):
    # y1_ref:   (B_TILE, Cout, To) bf16 raw conv1 output
    # aff1_ref: (Cout, 2)          f32  folded BN1 [scale, shift]
    # w2_ref:   (4, Cout, Cout)    f32  tap-major conv2 weights
    # y2_ref:   (B_TILE, Cout, To) bf16 raw conv2 output
    # st_ref:   (1, Cout, 2)       f32  per-batch-tile [sum, sumsq]
    bt, c, to = y1_ref.shape
    scale = aff1_ref[:, 0:1]                       # (Cout, 1), broadcasts over lanes
    shift = aff1_ref[:, 1:2]

    st = jnp.zeros((c, 2), jnp.float32)
    for b in range(bt):
        h = _lrelu(y1_ref[b].astype(jnp.float32) * scale + shift)   # BN1+LeakyReLU, f32
        # pad left 1 (conv pad), right 2 (ConstantPad1d((0,1)) + conv pad), in-register
        hp = jnp.concatenate([jnp.zeros((c, 1), jnp.float32), h,
                              jnp.zeros((c, 2), jnp.float32)], axis=-1)   # (C, To+3)
        y2 = jnp.dot(w2_ref[0], hp[:, 0:to], preferred_element_type=jnp.float32)
        for k in range(1, 4):                      # accumulating dots, no 4x tap concat
            y2 = y2 + jnp.dot(w2_ref[k], hp[:, k:k + to],
                              preferred_element_type=jnp.float32)
        y2_ref[b] = y2.astype(y2_ref.dtype)
        s = jnp.sum(y2, axis=-1, keepdims=True)
        ss = jnp.sum(y2 * y2, axis=-1, keepdims=True)
        st = st + jnp.concatenate([s, ss], axis=-1)
    st_ref[...] = st[None]


def _k3_output_kernel(y2_ref, sc_ref, aff_ref, o_ref):
    # y2_ref/sc_ref: (B_TILE, Cout, To) bf16;  aff_ref: (Cout, 4) fused affines
    # o_ref:         (B_TILE, Cout, To) f32 -- already the final PyTorch layout
    s2 = aff_ref[:, 0:1]
    b2 = aff_ref[:, 1:2]
    ss = aff_ref[:, 2:3]
    bs = aff_ref[:, 3:4]
    y = (y2_ref[...].astype(jnp.float32) * s2 + b2
         + sc_ref[...].astype(jnp.float32) * ss + bs)
    o_ref[...] = _lrelu(y)


# --------------------------------- wrapper ------------------------------------

def residual_block(x, params):
    """x: (N, Cin, L) float32 (PyTorch NCL). Returns (N, Cout, L//2) float32."""
    w1, w2, ws, g1, b1, g2, b2, gs, bs = params
    N, Cin, L = x.shape
    Cout = w1.shape[0]
    assert L % 2 == 0
    # NOTE: with Cin == Cout the PyTorch module's identity shortcut has length L
    # while the residual path has length L//2 -> shape-inconsistent; only the
    # conv-shortcut variant is implemented.
    assert Cin != Cout, "identity shortcut (Cin==Cout) is shape-inconsistent in the original module"
    To = L // 2
    cnt = float(N * To)
    f32 = jnp.float32
    io = IO_DTYPE

    # ---- wrapper-side layout plumbing (~1x input bytes, no im2col duplication) ----
    # Activations keep the PyTorch (N, C, T) layout: time on the lane axis.
    xp = jnp.pad(x.astype(f32), ((0, 0), (0, 0), (1, 1)))     # conv1 pad = 1
    xe = xp[:, :, 0::2]                                       # (N, Cin, To+1)  x_pad[2t]
    xo = xp[:, :, 1::2]                                       # (N, Cin, To+1)  x_pad[2t+1]

    # tap-major weights: wcat[k] = [w1[:, :, k] ; ws[:, :, k]]   (2*Cout, Cin)
    wcat = jnp.transpose(jnp.concatenate([w1, ws], axis=0), (2, 0, 1)).astype(f32)
    w2p = jnp.transpose(w2, (2, 0, 1)).astype(f32)            # (4, Cout, Cout)
    # TODO(synk): for production channel counts (C >= 128) cast wcat/w2p and the
    # activation taps to bf16 (keep preferred_element_type=f32) for MXU throughput.

    # batch tile: biggest divisor of N that keeps the per-step blocks under budget
    bps = 8 * Cin * (To + 1) + 16 * Cout * To     # f32 inputs + bf16 I/O + f32 accum
    B_TILE = _pick_batch_tile(N, bps)
    nbt = N // B_TILE
    vmem = _vmem_limit(B_TILE * bps + 16 * Cout * (2 * Cout + Cin))

    # ---- K1: fused conv1 + shortcut (4 accumulating dots) + BN stats partials ----
    y1_raw, sc_raw, st1 = pl.pallas_call(
        _k1_fused_conv_kernel,
        grid=(nbt,),
        in_specs=[
            pl.BlockSpec((B_TILE, Cin, To + 1), lambda i: (i, 0, 0)),
            pl.BlockSpec((B_TILE, Cin, To + 1), lambda i: (i, 0, 0)),
            pl.BlockSpec((4, 2 * Cout, Cin), lambda i: (0, 0, 0)),
        ],
        out_specs=[
            pl.BlockSpec((B_TILE, Cout, To), lambda i: (i, 0, 0)),
            pl.BlockSpec((B_TILE, Cout, To), lambda i: (i, 0, 0)),
            pl.BlockSpec((1, 2 * Cout, 2), lambda i: (i, 0, 0)),
        ],
        out_shape=[
            jax.ShapeDtypeStruct((N, Cout, To), io),
            jax.ShapeDtypeStruct((N, Cout, To), io),
            jax.ShapeDtypeStruct((nbt, 2 * Cout, 2), f32),
        ],
        compiler_params=pltpu.CompilerParams(
            dimension_semantics=("parallel",), vmem_limit_bytes=vmem),
    )(xe, xo, wcat)

    # Fold BN1 / BN_shortcut statistics into per-channel affines (O(C) glue).
    st1_sum = jnp.sum(st1, axis=0)                            # (2*Cout, 2)
    aff1 = _bn_affine(st1_sum[:Cout], g1, b1, cnt)            # (Cout, 2)
    affs = _bn_affine(st1_sum[Cout:], gs, bs, cnt)            # (Cout, 2)

    # ---- K2: BN1 + LeakyReLU + pad + conv2 (4 accumulating dots) + BN2 stats ----
    # TODO(synk): each step holds a batch tile with the full time extent (conv2 has
    # a 3-tap halo along time); for very long sequences on v7x tile the time axis
    # with an element-indexed halo window or a manual-DMA pipeline instead.
    y2_raw, st2 = pl.pallas_call(
        _k2_conv2_kernel,
        grid=(nbt,),
        in_specs=[
            pl.BlockSpec((B_TILE, Cout, To), lambda i: (i, 0, 0)),
            pl.BlockSpec((Cout, 2), lambda i: (0, 0)),
            pl.BlockSpec((4, Cout, Cout), lambda i: (0, 0, 0)),
        ],
        out_specs=[
            pl.BlockSpec((B_TILE, Cout, To), lambda i: (i, 0, 0)),
            pl.BlockSpec((1, Cout, 2), lambda i: (i, 0, 0)),
        ],
        out_shape=[
            jax.ShapeDtypeStruct((N, Cout, To), io),
            jax.ShapeDtypeStruct((nbt, Cout, 2), f32),
        ],
        compiler_params=pltpu.CompilerParams(
            dimension_semantics=("parallel",), vmem_limit_bytes=vmem),
    )(y1_raw, aff1, w2p)

    aff2 = _bn_affine(jnp.sum(st2, axis=0), g2, b2, cnt)      # (Cout, 2)
    aff23 = jnp.concatenate([aff2, affs], axis=-1)            # (Cout, 4) fused K3 operand

    # ---- K3: BN2(y2) + BN_s(shortcut) + add + LeakyReLU, final layout directly ----
    out = pl.pallas_call(
        _k3_output_kernel,
        grid=(nbt,),
        in_specs=[
            pl.BlockSpec((B_TILE, Cout, To), lambda i: (i, 0, 0)),
            pl.BlockSpec((B_TILE, Cout, To), lambda i: (i, 0, 0)),
            pl.BlockSpec((Cout, 4), lambda i: (0, 0)),
        ],
        out_specs=pl.BlockSpec((B_TILE, Cout, To), lambda i: (i, 0, 0)),
        out_shape=jax.ShapeDtypeStruct((N, Cout, To), f32),
        compiler_params=pltpu.CompilerParams(
            dimension_semantics=("parallel",), vmem_limit_bytes=vmem),
    )(y2_raw, sc_raw, aff23)

    return out            # already (N, Cout, L//2) -- PyTorch layout, no transpose


# ----------------------------- pure-JAX reference ------------------------------

def _conv1d_ref(x, w, stride, pad):
    return jax.lax.conv_general_dilated(
        x, w, window_strides=(stride,), padding=[(pad, pad)],
        dimension_numbers=('NCH', 'OIH', 'NCH'))


def _bn_ref(y, g, b):
    mu = jnp.mean(y, axis=(0, 2), keepdims=True)
    var = jnp.mean((y - mu) ** 2, axis=(0, 2), keepdims=True)
    return (y - mu) / jnp.sqrt(var + EPS) * g[None, :, None] + b[None, :, None]


def _lrelu_ref(y):
    return jnp.where(y > 0, y, NEG_SLOPE * y)


def residual_block_ref(x, params):
    w1, w2, ws, g1, b1, g2, b2, gs, bs = params
    r = _conv1d_ref(x, w1, 2, 1)
    r = _lrelu_ref(_bn_ref(r, g1, b1))
    r = jnp.pad(r, ((0, 0), (0, 0), (0, 1)))
    r = _conv1d_ref(r, w2, 1, 1)
    r = _bn_ref(r, g2, b2)
    s = _bn_ref(_conv1d_ref(x, ws, 2, 1), gs, bs)
    return _lrelu_ref(r + s)


# ------------------------------------ main -------------------------------------

if __name__ == "__main__":
    N, Cin, Cout, L = 2, 4, 8, 16

    key = jax.random.PRNGKey(0)
    ks = jax.random.split(key, 10)
    x = jax.random.normal(ks[0], (N, Cin, L), jnp.float32)

    w1 = 0.2 * jax.random.normal(ks[1], (Cout, Cin, 4), jnp.float32)
    w2 = 0.2 * jax.random.normal(ks[2], (Cout, Cout, 4), jnp.float32)
    ws = 0.2 * jax.random.normal(ks[3], (Cout, Cin, 4), jnp.float32)
    g1 = 1.0 + 0.1 * jax.random.normal(ks[4], (Cout,), jnp.float32)
    b1 = 0.1 * jax.random.normal(ks[5], (Cout,), jnp.float32)
    g2 = 1.0 + 0.1 * jax.random.normal(ks[6], (Cout,), jnp.float32)
    b2 = 0.1 * jax.random.normal(ks[7], (Cout,), jnp.float32)
    gs = 1.0 + 0.1 * jax.random.normal(ks[8], (Cout,), jnp.float32)
    bs = 0.1 * jax.random.normal(ks[9], (Cout,), jnp.float32)
    params = (w1, w2, ws, g1, b1, g2, b2, gs, bs)

    run = jax.jit(residual_block)
    out = jax.block_until_ready(run(x, params))
    ref = jax.block_until_ready(residual_block_ref(x, params))

    assert out.shape == (N, Cout, L // 2)
    # tolerance accounts for the bf16 HBM round-trips of the intermediates
    np.testing.assert_allclose(np.asarray(out), np.asarray(ref), rtol=3e-2, atol=3e-2)

    # TODO(synk): BatchNorm running_mean/running_var buffer updates (a training-time
    # side effect of the PyTorch module) are not materialized here.
    print("KERNEL_OK")
</pallas_src>

<mosaic_0001>
module attributes {stable_mosaic.version = 11 : i64} {
  func.func @_k3_output_kernel(%arg0: i32, %arg1: memref<2x8x8xbf16, #tpu.memory_space<vmem>>, %arg2: memref<2x8x8xbf16, #tpu.memory_space<vmem>>, %arg3: memref<8x4xf32, #tpu.memory_space<vmem>>, %arg4: memref<2x8x8xf32, #tpu.memory_space<vmem>>) attributes {dimension_semantics = [#tpu.dimension_semantics<parallel>], iteration_bounds = array<i64: 1>, scalar_prefetch = 0 : i64, scratch_operands = 0 : i64, tpu.core_type = #tpu.core_type<tc>, window_params = [{transform_indices = @transform_0, window_bounds = array<i64: 2, 8, 8>}, {transform_indices = @transform_1, window_bounds = array<i64: 2, 8, 8>}, {pipeline_mode = #tpu.pipeline_mode<synchronous>, transform_indices = @transform_2, window_bounds = array<i64: 8, 4>}, {transform_indices = @transform_3, window_bounds = array<i64: 2, 8, 8>}]} {
    %c0 = arith.constant 0 : index
    %c0_0 = arith.constant 0 : index
    %0 = vector.load %arg3[%c0, %c0_0] : memref<8x4xf32, #tpu.memory_space<vmem>>, vector<8x1xf32>
    %c0_1 = arith.constant 0 : index
    %c1 = arith.constant 1 : index
    %1 = vector.load %arg3[%c0_1, %c1] : memref<8x4xf32, #tpu.memory_space<vmem>>, vector<8x1xf32>
    %c0_2 = arith.constant 0 : index
    %c2 = arith.constant 2 : index
    %2 = vector.load %arg3[%c0_2, %c2] : memref<8x4xf32, #tpu.memory_space<vmem>>, vector<8x1xf32>
    %c0_3 = arith.constant 0 : index
    %c3 = arith.constant 3 : index
    %3 = vector.load %arg3[%c0_3, %c3] : memref<8x4xf32, #tpu.memory_space<vmem>>, vector<8x1xf32>
    %c0_4 = arith.constant 0 : index
    %c0_5 = arith.constant 0 : index
    %c0_6 = arith.constant 0 : index
    %4 = vector.load %arg1[%c0_4, %c0_5, %c0_6] : memref<2x8x8xbf16, #tpu.memory_space<vmem>>, vector<2x8x8xbf16>
    %5 = arith.extf %4 : vector<2x8x8xbf16> to vector<2x8x8xf32>
    %6 = vector.shape_cast %0 : vector<8x1xf32> to vector<1x8x1xf32>
    %7 = vector.broadcast %6 : vector<1x8x1xf32> to vector<2x8x8xf32>
    %8 = arith.mulf %5, %7 : vector<2x8x8xf32>
    %9 = vector.shape_cast %1 : vector<8x1xf32> to vector<1x8x1xf32>
    %10 = vector.broadcast %9 : vector<1x8x1xf32> to vector<2x8x8xf32>
    %11 = arith.addf %8, %10 : vector<2x8x8xf32>
    %c0_7 = arith.constant 0 : index
    %c0_8 = arith.constant 0 : index
    %c0_9 = arith.constant 0 : index
    %12 = vector.load %arg2[%c0_7, %c0_8, %c0_9] : memref<2x8x8xbf16, #tpu.memory_space<vmem>>, vector<2x8x8xbf16>
    %13 = arith.extf %12 : vector<2x8x8xbf16> to vector<2x8x8xf32>
    %14 = vector.shape_cast %2 : vector<8x1xf32> to vector<1x8x1xf32>
    %15 = vector.broadcast %14 : vector<1x8x1xf32> to vector<2x8x8xf32>
    %16 = arith.mulf %13, %15 : vector<2x8x8xf32>
    %17 = arith.addf %11, %16 : vector<2x8x8xf32>
    %18 = vector.shape_cast %3 : vector<8x1xf32> to vector<1x8x1xf32>
    %19 = vector.broadcast %18 : vector<1x8x1xf32> to vector<2x8x8xf32>
    %20 = arith.addf %17, %19 : vector<2x8x8xf32>
    %cst = arith.constant 0.000000e+00 : f32
    %21 = vector.broadcast %cst : f32 to vector<2x8x8xf32>
    %22 = arith.cmpf ogt, %20, %21 : vector<2x8x8xf32>
    %cst_10 = arith.constant 2.000000e-01 : f32
    %23 = vector.broadcast %cst_10 : f32 to vector<2x8x8xf32>
    %24 = arith.mulf %23, %20 : vector<2x8x8xf32>
    %25 = arith.select %22, %20, %24 : vector<2x8x8xi1>, vector<2x8x8xf32>
    %c0_11 = arith.constant 0 : index
    %c0_12 = arith.constant 0 : index
    %c0_13 = arith.constant 0 : index
    %26 = vector.load %arg4[%c0_11, %c0_12, %c0_13] : memref<2x8x8xf32, #tpu.memory_space<vmem>>, vector<2x8x8xf32>
    tpu.vector_store %arg4[%c0_11, %c0_12, %c0_13], %25 {strides = array<i32>} : memref<2x8x8xf32, #tpu.memory_space<vmem>>, vector<2x8x8xf32>,
    return
  }
  func.func @transform_0(%arg0: i32) -> (i32, i32, i32) {
    %c0_i32 = arith.constant 0 : i32
    %c0_i32_0 = arith.constant 0 : i32
    %c0_i32_1 = arith.constant 0 : i32
    return %arg0, %c0_i32, %c0_i32_0 : i32, i32, i32
  }
  func.func @transform_1(%arg0: i32) -> (i32, i32, i32) {
    %c0_i32 = arith.constant 0 : i32
    %c0_i32_0 = arith.constant 0 : i32
    %c0_i32_1 = arith.constant 0 : i32
    return %arg0, %c0_i32, %c0_i32_0 : i32, i32, i32
  }
  func.func @transform_2(%arg0: i32) -> (i32, i32) {
    %c0_i32 = arith.constant 0 : i32
    %c0_i32_0 = arith.constant 0 : i32
    %c0_i32_1 = arith.constant 0 : i32
    return %c0_i32, %c0_i32_0 : i32, i32
  }
  func.func @transform_3(%arg0: i32) -> (i32, i32, i32) {
    %c0_i32 = arith.constant 0 : i32
    %c0_i32_0 = arith.constant 0 : i32
    %c0_i32_1 = arith.constant 0 : i32
    return %arg0, %c0_i32, %c0_i32_0 : i32, i32, i32
  }
}

module attributes {stable_mosaic.version = 11 : i64} {
  func.func @_k1_fused_conv_kernel(%arg0: i32, %arg1: memref<2x4x9xf32, #tpu.memory_space<vmem>>, %arg2: memref<2x4x9xf32, #tpu.memory_space<vmem>>, %arg3: memref<4x16x4xf32, #tpu.memory_space<vmem>>, %arg4: memref<2x8x8xbf16, #tpu.memory_space<vmem>>, %arg5: memref<2x8x8xbf16, #tpu.memory_space<vmem>>, %arg6: memref<1x16x2xf32, #tpu.memory_space<vmem>>) attributes {dimension_semantics = [#tpu.dimension_semantics<parallel>], iteration_bounds = array<i64: 1>, scalar_prefetch = 0 : i64, scratch_operands = 0 : i64, tpu.core_type = #tpu.core_type<tc>, window_params = [{transform_indices = @transform_0, window_bounds = array<i64: 2, 4, 9>}, {transform_indices = @transform_1, window_bounds = array<i64: 2, 4, 9>}, {pipeline_mode = #tpu.pipeline_mode<synchronous>, transform_indices = @transform_2, window_bounds = array<i64: 4, 16, 4>}, {transform_indices = @transform_3, window_bounds = array<i64: 2, 8, 8>}, {transform_indices = @transform_4, window_bounds = array<i64: 2, 8, 8>}, {transform_indices = @transform_5, window_bounds = array<i64: 1, 16, 2>}]} {
    %cst = arith.constant 0.000000e+00 : f32
    %0 = vector.broadcast %cst : f32 to vector<16x2xf32>
    %c0 = arith.constant 0 : index
    %c0_0 = arith.constant 0 : index
    %c0_1 = arith.constant 0 : index
    %1 = vector.load %arg1[%c0, %c0_0, %c0_1] : memref<2x4x9xf32, #tpu.memory_space<vmem>>, vector<1x4x9xf32>
    %2 = vector.shape_cast %1 : vector<1x4x9xf32> to vector<4x9xf32>
    %c0_2 = arith.constant 0 : index
    %c0_3 = arith.constant 0 : index
    %c0_4 = arith.constant 0 : index
    %3 = vector.load %arg2[%c0_2, %c0_3, %c0_4] : memref<2x4x9xf32, #tpu.memory_space<vmem>>, vector<1x4x9xf32>
    %4 = vector.shape_cast %3 : vector<1x4x9xf32> to vector<4x9xf32>
    %5 = vector.extract_strided_slice %2 {offsets = [0, 0], sizes = [4, 8], strides = [1, 1]} : vector<4x9xf32> to vector<4x8xf32>
    %6 = vector.extract_strided_slice %4 {offsets = [0, 0], sizes = [4, 8], strides = [1, 1]} : vector<4x9xf32> to vector<4x8xf32>
    %7 = vector.extract_strided_slice %2 {offsets = [0, 1], sizes = [4, 8], strides = [1, 1]} : vector<4x9xf32> to vector<4x8xf32>
    %8 = vector.extract_strided_slice %4 {offsets = [0, 1], sizes = [4, 8], strides = [1, 1]} : vector<4x9xf32> to vector<4x8xf32>
    %c0_5 = arith.constant 0 : index
    %c0_6 = arith.constant 0 : index
    %c0_7 = arith.constant 0 : index
    %9 = vector.load %arg3[%c0_5, %c0_6, %c0_7] : memref<4x16x4xf32, #tpu.memory_space<vmem>>, vector<1x16x4xf32>
    %10 = vector.shape_cast %9 : vector<1x16x4xf32> to vector<16x4xf32>
    %cst_8 = arith.constant dense<0.000000e+00> : vector<16x8xf32>
    %11 = tpu.matmul %10, %5, %cst_8 {dimension_numbers = #tpu.dot_dimension_numbers<[1], [0], [0], [1], [0, 0, 1, 1], [], []>} : vector<16x4xf32>, vector<4x8xf32>, vector<16x8xf32> -> vector<16x8xf32>
    %c1 = arith.constant 1 : index
    %c0_9 = arith.constant 0 : index
    %c0_10 = arith.constant 0 : index
    %12 = vector.load %arg3[%c1, %c0_9, %c0_10] : memref<4x16x4xf32, #tpu.memory_space<vmem>>, vector<1x16x4xf32>
    %13 = vector.shape_cast %12 : vector<1x16x4xf32> to vector<16x4xf32>
    %cst_11 = arith.constant dense<0.000000e+00> : vector<16x8xf32>
    %14 = tpu.matmul %13, %6, %cst_11 {dimension_numbers = #tpu.dot_dimension_numbers<[1], [0], [0], [1], [0, 0, 1, 1], [], []>} : vector<16x4xf32>, vector<4x8xf32>, vector<16x8xf32> -> vector<16x8xf32>
    %15 = arith.addf %11, %14 : vector<16x8xf32>
    %c2 = arith.constant 2 : index
    %c0_12 = arith.constant 0 : index
    %c0_13 = arith.constant 0 : index
    %16 = vector.load %arg3[%c2, %c0_12, %c0_13] : memref<4x16x4xf32, #tpu.memory_space<vmem>>, vector<1x16x4xf32>
    %17 = vector.shape_cast %16 : vector<1x16x4xf32> to vector<16x4xf32>
    %cst_14 = arith.constant dense<0.000000e+00> : vector<16x8xf32>
    %18 = tpu.matmul %17, %7, %cst_14 {dimension_numbers = #tpu.dot_dimension_numbers<[1], [0], [0], [1], [0, 0, 1, 1], [], []>} : vector<16x4xf32>, vector<4x8xf32>, vector<16x8xf32> -> vector<16x8xf32>
    %19 = arith.addf %15, %18 : vector<16x8xf32>
    %c3 = arith.constant 3 : index
    %c0_15 = arith.constant 0 : index
    %c0_16 = arith.constant 0 : index
    %20 = vector.load %arg3[%c3, %c0_15, %c0_16] : memref<4x16x4xf32, #tpu.memory_space<vmem>>, vector<1x16x4xf32>
    %21 = vector.shape_cast %20 : vector<1x16x4xf32> to vector<16x4xf32>
    %cst_17 = arith.constant dense<0.000000e+00> : vector<16x8xf32>
    %22 = tpu.matmul %21, %8, %cst_17 {dimension_numbers = #tpu.dot_dimension_numbers<[1], [0], [0], [1], [0, 0, 1, 1], [], []>} : vector<16x4xf32>, vector<4x8xf32>, vector<16x8xf32> -> vector<16x8xf32>
    %23 = arith.addf %19, %22 : vector<16x8xf32>
    %24 = vector.extract_strided_slice %23 {offsets = [0, 0], sizes = [8, 8], strides = [1, 1]} : vector<16x8xf32> to vector<8x8xf32>
    %25 = arith.truncf %24 : vector<8x8xf32> to vector<8x8xbf16>
    %c0_18 = arith.constant 0 : index
    %c0_19 = arith.constant 0 : index
    %c0_20 = arith.constant 0 : index
    %26 = vector.load %arg4[%c0_18, %c0_19, %c0_20] : memref<2x8x8xbf16, #tpu.memory_space<vmem>>, vector<1x8x8xbf16>
    %27 = vector.shape_cast %26 : vector<1x8x8xbf16> to vector<8x8xbf16>
    %28 = vector.shape_cast %25 : vector<8x8xbf16> to vector<1x8x8xbf16>
    tpu.vector_store %arg4[%c0_18, %c0_19, %c0_20], %28 {strides = array<i32>} : memref<2x8x8xbf16, #tpu.memory_space<vmem>>, vector<1x8x8xbf16>,
    %29 = vector.extract_strided_slice %23 {offsets = [8, 0], sizes = [8, 8], strides = [1, 1]} : vector<16x8xf32> to vector<8x8xf32>
    %30 = arith.truncf %29 : vector<8x8xf32> to vector<8x8xbf16>
    %c0_21 = arith.constant 0 : index
    %c0_22 = arith.constant 0 : index
    %c0_23 = arith.constant 0 : index
    %31 = vector.load %arg5[%c0_21, %c0_22, %c0_23] : memref<2x8x8xbf16, #tpu.memory_space<vmem>>, vector<1x8x8xbf16>
    %32 = vector.shape_cast %31 : vector<1x8x8xbf16> to vector<8x8xbf16>
    %33 = vector.shape_cast %30 : vector<8x8xbf16> to vector<1x8x8xbf16>
    tpu.vector_store %arg5[%c0_21, %c0_22, %c0_23], %33 {strides = array<i32>} : memref<2x8x8xbf16, #tpu.memory_space<vmem>>, vector<1x8x8xbf16>,
    %cst_24 = arith.constant dense<0.000000e+00> : vector<16xf32>
    %34 = vector.multi_reduction <add>, %23, %cst_24 [1] : vector<16x8xf32> to vector<16xf32>
    %35 = vector.shape_cast %34 : vector<16xf32> to vector<16x1xf32>
    %36 = arith.mulf %23, %23 : vector<16x8xf32>
    %cst_25 = arith.constant dense<0.000000e+00> : vector<16xf32>
    %37 = vector.multi_reduction <add>, %36, %cst_25 [1] : vector<16x8xf32> to vector<16xf32>
    %38 = vector.shape_cast %37 : vector<16xf32> to vector<16x1xf32>
    %39 = tpu.concatenate %35, %38 in 1 : vector<16x1xf32>, vector<16x1xf32> -> vector<16x2xf32>
    %40 = arith.addf %0, %39 : vector<16x2xf32>
    %c1_26 = arith.constant 1 : index
    %c0_27 = arith.constant 0 : index
    %c0_28 = arith.constant 0 : index
    %41 = vector.load %arg1[%c1_26, %c0_27, %c0_28] : memref<2x4x9xf32, #tpu.memory_space<vmem>>, vector<1x4x9xf32>
    %42 = vector.shape_cast %41 : vector<1x4x9xf32> to vector<4x9xf32>
    %c1_29 = arith.constant 1 : index
    %c0_30 = arith.constant 0 : index
    %c0_31 = arith.constant 0 : index
    %43 = vector.load %arg2[%c1_29, %c0_30, %c0_31] : memref<2x4x9xf32, #tpu.memory_space<vmem>>, vector<1x4x9xf32>
    %44 = vector.shape_cast %43 : vector<1x4x9xf32> to vector<4x9xf32>
    %45 = vector.extract_strided_slice %42 {offsets = [0, 0], sizes = [4, 8], strides = [1, 1]} : vector<4x9xf32> to vector<4x8xf32>
    %46 = vector.extract_strided_slice %44 {offsets = [0, 0], sizes = [4, 8], strides = [1, 1]} : vector<4x9xf32> to vector<4x8xf32>
    %47 = vector.extract_strided_slice %42 {offsets = [0, 1], sizes = [4, 8], strides = [1, 1]} : vector<4x9xf32> to vector<4x8xf32>
    %48 = vector.extract_strided_slice %44 {offsets = [0, 1], sizes = [4, 8], strides = [1, 1]} : vector<4x9xf32> to vector<4x8xf32>
    %c0_32 = arith.constant 0 : index
    %c0_33 = arith.constant 0 : index
    %c0_34 = arith.constant 0 : index
    %49 = vector.load %arg3[%c0_32, %c0_33, %c0_34] : memref<4x16x4xf32, #tpu.memory_space<vmem>>, vector<1x16x4xf32>
    %50 = vector.shape_cast %49 : vector<1x16x4xf32> to vector<16x4xf32>
    %cst_35 = arith.constant dense<0.000000e+00> : vector<16x8xf32>
    %51 = tpu.matmul %50, %45, %cst_35 {dimension_numbers = #tpu.dot_dimension_numbers<[1], [0], [0], [1], [0, 0, 1, 1], [], []>} : vector<16x4xf32>, vector<4x8xf32>, vector<16x8xf32> -> vector<16x8xf32>
    %c1_36 = arith.constant 1 : index
    %c0_37 = arith.constant 0 : index
    %c0_38 = arith.constant 0 : index
    %52 = vector.load %arg3[%c1_36, %c0_37, %c0_38] : memref<4x16x4xf32, #tpu.memory_space<vmem>>, vector<1x16x4xf32>
    %53 = vector.shape_cast %52 : vector<1x16x4xf32> to vector<16x4xf32>
    %cst_39 = arith.constant dense<0.000000e+00> : vector<16x8xf32>
    %54 = tpu.matmul %53, %46, %cst_39 {dimension_numbers = #tpu.dot_dimension_numbers<[1], [0], [0], [1], [0, 0, 1, 1], [], []>} : vector<16x4xf32>, vector<4x8xf32>, vector<16x8xf32> -> vector<16x8xf32>
    %55 = arith.addf %51, %54 : vector<16x8xf32>
    %c2_40 = arith.constant 2 : index
    %c0_41 = arith.constant 0 : index
    %c0_42 = arith.constant 0 : index
    %56 = vector.load %arg3[%c2_40, %c0_41, %c0_42] : memref<4x16x4xf32, #tpu.memory_space<vmem>>, vector<1x16x4xf32>
    %57 = vector.shape_cast %56 : vector<1x16x4xf32> to vector<16x4xf32>
    %cst_43 = arith.constant dense<0.000000e+00> : vector<16x8xf32>
    %58 = tpu.matmul %57, %47, %cst_43 {dimension_numbers = #tpu.dot_dimension_numbers<[1], [0], [0], [1], [0, 0, 1, 1], [], []>} : vector<16x4xf32>, vector<4x8xf32>, vector<16x8xf32> -> vector<16x8xf32>
    %59 = arith.addf %55, %58 : vector<16x8xf32>
    %c3_44 = arith.constant 3 : index
    %c0_45 = arith.constant 0 : index
    %c0_46 = arith.constant 0 : index
    %60 = vector.load %arg3[%c3_44, %c0_45, %c0_46] : memref<4x16x4xf32, #tpu.memory_space<vmem>>, vector<1x16x4xf32>
    %61 = vector.shape_cast %60 : vector<1x16x4xf32> to vector<16x4xf32>
    %cst_47 = arith.constant dense<0.000000e+00> : vector<16x8xf32>
    %62 = tpu.matmul %61, %48, %cst_47 {dimension_numbers = #tpu.dot_dimension_numbers<[1], [0], [0], [1], [0, 0, 1, 1], [], []>} : vector<16x4xf32>, vector<4x8xf32>, vector<16x8xf32> -> vector<16x8xf32>
    %63 = arith.addf %59, %62 : vector<16x8xf32>
    %64 = vector.extract_strided_slice %63 {offsets = [0, 0], sizes = [8, 8], strides = [1, 1]} : vector<16x8xf32> to vector<8x8xf32>
    %65 = arith.truncf %64 : vector<8x8xf32> to vector<8x8xbf16>
    %c1_48 = arith.constant 1 : index
    %c0_49 = arith.constant 0 : index
    %c0_50 = arith.constant 0 : index
    %66 = vector.load %arg4[%c1_48, %c0_49, %c0_50] : memref<2x8x8xbf16, #tpu.memory_space<vmem>>, vector<1x8x8xbf16>
    %67 = vector.shape_cast %66 : vector<1x8x8xbf16> to vector<8x8xbf16>
    %68 = vector.shape_cast %65 : vector<8x8xbf16> to vector<1x8x8xbf16>
    tpu.vector_store %arg4[%c1_48, %c0_49, %c0_50], %68 {strides = array<i32>} : memref<2x8x8xbf16, #tpu.memory_space<vmem>>, vector<1x8x8xbf16>,
    %69 = vector.extract_strided_slice %63 {offsets = [8, 0], sizes = [8, 8], strides = [1, 1]} : vector<16x8xf32> to vector<8x8xf32>
    %70 = arith.truncf %69 : vector<8x8xf32> to vector<8x8xbf16>
    %c1_51 = arith.constant 1 : index
    %c0_52 = arith.constant 0 : index
    %c0_53 = arith.constant 0 : index
    %71 = vector.load %arg5[%c1_51, %c0_52, %c0_53] : memref<2x8x8xbf16, #tpu.memory_space<vmem>>, vector<1x8x8xbf16>
    %72 = vector.shape_cast %71 : vector<1x8x8xbf16> to vector<8x8xbf16>
    %73 = vector.shape_cast %70 : vector<8x8xbf16> to vector<1x8x8xbf16>
    tpu.vector_store %arg5[%c1_51, %c0_52, %c0_53], %73 {strides = array<i32>} : memref<2x8x8xbf16, #tpu.memory_space<vmem>>, vector<1x8x8xbf16>,
    %cst_54 = arith.constant dense<0.000000e+00> : vector<16xf32>
    %74 = vector.multi_reduction <add>, %63, %cst_54 [1] : vector<16x8xf32> to vector<16xf32>
    %75 = vector.shape_cast %74 : vector<16xf32> to vector<16x1xf32>
    %76 = arith.mulf %63, %63 : vector<16x8xf32>
    %cst_55 = arith.constant dense<0.000000e+00> : vector<16xf32>
    %77 = vector.multi_reduction <add>, %76, %cst_55 [1] : vector<16x8xf32> to vector<16xf32>
    %78 = vector.shape_cast %77 : vector<16xf32> to vector<16x1xf32>
    %79 = tpu.concatenate %75, %78 in 1 : vector<16x1xf32>, vector<16x1xf32> -> vector<16x2xf32>
    %80 = arith.addf %40, %79 : vector<16x2xf32>
    %81 = vector.shape_cast %80 : vector<16x2xf32> to vector<1x16x2xf32>
    %c0_56 = arith.constant 0 : index
    %c0_57 = arith.constant 0 : index
    %c0_58 = arith.constant 0 : index
    %82 = vector.load %arg6[%c0_56, %c0_57, %c0_58] : memref<1x16x2xf32, #tpu.memory_space<vmem>>, vector<1x16x2xf32>
    tpu.vector_store %arg6[%c0_56, %c0_57, %c0_58], %81 {strides = array<i32>} : memref<1x16x2xf32, #tpu.memory_space<vmem>>, vector<1x16x2xf32>,
    return
  }
  func.func @transform_0(%arg0: i32) -> (i32, i32, i32) {
    %c0_i32 = arith.constant 0 : i32
    %c0_i32_0 = arith.constant 0 : i32
    %c0_i32_1 = arith.constant 0 : i32
    return %arg0, %c0_i32, %c0_i32_0 : i32, i32, i32
  }
  func.func @transform_1(%arg0: i32) -> (i32, i32, i32) {
    %c0_i32 = arith.constant 0 : i32
    %c0_i32_0 = arith.constant 0 : i32
    %c0_i32_1 = arith.constant 0 : i32
    return %arg0, %c0_i32, %c0_i32_0 : i32, i32, i32
  }
  func.func @transform_2(%arg0: i32) -> (i32, i32, i32) {
    %c0_i32 = arith.constant 0 : i32
    %c0_i32_0 = arith.constant 0 : i32
    %c0_i32_1 = arith.constant 0 : i32
    %c0_i32_2 = arith.constant 0 : i32
    return %c0_i32, %c0_i32_0, %c0_i32_1 : i32, i32, i32
  }
  func.func @transform_3(%arg0: i32) -> (i32, i32, i32) {
    %c0_i32 = arith.constant 0 : i32
    %c0_i32_0 = arith.constant 0 : i32
    %c0_i32_1 = arith.constant 0 : i32
    return %arg0, %c0_i32, %c0_i32_0 : i32, i32, i32
  }
  func.func @transform_4(%arg0: i32) -> (i32, i32, i32) {
    %c0_i32 = arith.constant 0 : i32
    %c0_i32_0 = arith.constant 0 : i32
    %c0_i32_1 = arith.constant 0 : i32
    return %arg0, %c0_i32, %c0_i32_0 : i32, i32, i32
  }
  func.func @transform_5(%arg0: i32) -> (i32, i32, i32) {
    %c0_i32 = arith.constant 0 : i32
    %c0_i32_0 = arith.constant 0 : i32
    %c0_i32_1 = arith.constant 0 : i32
    return %arg0, %c0_i32, %c0_i32_0 : i32, i32, i32
  }
}

module attributes {stable_mosaic.version = 11 : i64} {
  func.func @_k2_conv2_kernel(%arg0: i32, %arg1: memref<2x8x8xbf16, #tpu.memory_space<vmem>>, %arg2: memref<8x2xf32, #tpu.memory_space<vmem>>, %arg3: memref<4x8x8xf32, #tpu.memory_space<vmem>>, %arg4: memref<2x8x8xbf16, #tpu.memory_space<vmem>>, %arg5: memref<1x8x2xf32, #tpu.memory_space<vmem>>) attributes {dimension_semantics = [#tpu.dimension_semantics<parallel>], iteration_bounds = array<i64: 1>, scalar_prefetch = 0 : i64, scratch_operands = 0 : i64, tpu.core_type = #tpu.core_type<tc>, window_params = [{transform_indices = @transform_0, window_bounds = array<i64: 2, 8, 8>}, {pipeline_mode = #tpu.pipeline_mode<synchronous>, transform_indices = @transform_1, window_bounds = array<i64: 8, 2>}, {pipeline_mode = #tpu.pipeline_mode<synchronous>, transform_indices = @transform_2, window_bounds = array<i64: 4, 8, 8>}, {transform_indices = @transform_3, window_bounds = array<i64: 2, 8, 8>}, {transform_indices = @transform_4, window_bounds = array<i64: 1, 8, 2>}]} {
    %c0 = arith.constant 0 : index
    %c0_0 = arith.constant 0 : index
    %0 = vector.load %arg2[%c0, %c0_0] : memref<8x2xf32, #tpu.memory_space<vmem>>, vector<8x1xf32>
    %c0_1 = arith.constant 0 : index
    %c1 = arith.constant 1 : index
    %1 = vector.load %arg2[%c0_1, %c1] : memref<8x2xf32, #tpu.memory_space<vmem>>, vector<8x1xf32>
    %cst = arith.constant 0.000000e+00 : f32
    %2 = vector.broadcast %cst : f32 to vector<8x2xf32>
    %c0_2 = arith.constant 0 : index
    %c0_3 = arith.constant 0 : index
    %c0_4 = arith.constant 0 : index
    %3 = vector.load %arg1[%c0_2, %c0_3, %c0_4] : memref<2x8x8xbf16, #tpu.memory_space<vmem>>, vector<1x8x8xbf16>
    %4 = vector.shape_cast %3 : vector<1x8x8xbf16> to vector<8x8xbf16>
    %5 = arith.extf %4 : vector<8x8xbf16> to vector<8x8xf32>
    %6 = vector.broadcast %0 : vector<8x1xf32> to vector<8x8xf32>
    %7 = arith.mulf %5, %6 : vector<8x8xf32>
    %8 = vector.broadcast %1 : vector<8x1xf32> to vector<8x8xf32>
    %9 = arith.addf %7, %8 : vector<8x8xf32>
    %cst_5 = arith.constant 0.000000e+00 : f32
    %10 = vector.broadcast %cst_5 : f32 to vector<8x8xf32>
    %11 = arith.cmpf ogt, %9, %10 : vector<8x8xf32>
    %cst_6 = arith.constant 2.000000e-01 : f32
    %12 = vector.broadcast %cst_6 : f32 to vector<8x8xf32>
    %13 = arith.mulf %12, %9 : vector<8x8xf32>
    %14 = arith.select %11, %9, %13 : vector<8x8xi1>, vector<8x8xf32>
    %cst_7 = arith.constant 0.000000e+00 : f32
    %15 = vector.broadcast %cst_7 : f32 to vector<8x1xf32>
    %cst_8 = arith.constant 0.000000e+00 : f32
    %16 = vector.broadcast %cst_8 : f32 to vector<8x2xf32>
    %17 = tpu.concatenate %15, %14, %16 in 1 : vector<8x1xf32>, vector<8x8xf32>, vector<8x2xf32> -> vector<8x11xf32>
    %c0_9 = arith.constant 0 : index
    %c0_10 = arith.constant 0 : index
    %c0_11 = arith.constant 0 : index
    %18 = vector.load %arg3[%c0_9, %c0_10, %c0_11] : memref<4x8x8xf32, #tpu.memory_space<vmem>>, vector<1x8x8xf32>
    %19 = vector.shape_cast %18 : vector<1x8x8xf32> to vector<8x8xf32>
    %20 = vector.extract_strided_slice %17 {offsets = [0, 0], sizes = [8, 8], strides = [1, 1]} : vector<8x11xf32> to vector<8x8xf32>
    %cst_12 = arith.constant dense<0.000000e+00> : vector<8x8xf32>
    %21 = tpu.matmul %19, %20, %cst_12 {dimension_numbers = #tpu.dot_dimension_numbers<[1], [0], [0], [1], [0, 0, 1, 1], [], []>} : vector<8x8xf32>, vector<8x8xf32>, vector<8x8xf32> -> vector<8x8xf32>
    %c1_13 = arith.constant 1 : index
    %c0_14 = arith.constant 0 : index
    %c0_15 = arith.constant 0 : index
    %22 = vector.load %arg3[%c1_13, %c0_14, %c0_15] : memref<4x8x8xf32, #tpu.memory_space<vmem>>, vector<1x8x8xf32>
    %23 = vector.shape_cast %22 : vector<1x8x8xf32> to vector<8x8xf32>
    %24 = vector.extract_strided_slice %17 {offsets = [0, 1], sizes = [8, 8], strides = [1, 1]} : vector<8x11xf32> to vector<8x8xf32>
    %cst_16 = arith.constant dense<0.000000e+00> : vector<8x8xf32>
    %25 = tpu.matmul %23, %24, %cst_16 {dimension_numbers = #tpu.dot_dimension_numbers<[1], [0], [0], [1], [0, 0, 1, 1], [], []>} : vector<8x8xf32>, vector<8x8xf32>, vector<8x8xf32> -> vector<8x8xf32>
    %26 = arith.addf %21, %25 : vector<8x8xf32>
    %c2 = arith.constant 2 : index
    %c0_17 = arith.constant 0 : index
    %c0_18 = arith.constant 0 : index
    %27 = vector.load %arg3[%c2, %c0_17, %c0_18] : memref<4x8x8xf32, #tpu.memory_space<vmem>>, vector<1x8x8xf32>
    %28 = vector.shape_cast %27 : vector<1x8x8xf32> to vector<8x8xf32>
    %29 = vector.extract_strided_slice %17 {offsets = [0, 2], sizes = [8, 8], strides = [1, 1]} : vector<8x11xf32> to vector<8x8xf32>
    %cst_19 = arith.constant dense<0.000000e+00> : vector<8x8xf32>
    %30 = tpu.matmul %28, %29, %cst_19 {dimension_numbers = #tpu.dot_dimension_numbers<[1], [0], [0], [1], [0, 0, 1, 1], [], []>} : vector<8x8xf32>, vector<8x8xf32>, vector<8x8xf32> -> vector<8x8xf32>
    %31 = arith.addf %26, %30 : vector<8x8xf32>
    %c3 = arith.constant 3 : index
    %c0_20 = arith.constant 0 : index
    %c0_21 = arith.constant 0 : index
    %32 = vector.load %arg3[%c3, %c0_20, %c0_21] : memref<4x8x8xf32, #tpu.memory_space<vmem>>, vector<1x8x8xf32>
    %33 = vector.shape_cast %32 : vector<1x8x8xf32> to vector<8x8xf32>
    %34 = vector.extract_strided_slice %17 {offsets = [0, 3], sizes = [8, 8], strides = [1, 1]} : vector<8x11xf32> to vector<8x8xf32>
    %cst_22 = arith.constant dense<0.000000e+00> : vector<8x8xf32>
    %35 = tpu.matmul %33, %34, %cst_22 {dimension_numbers = #tpu.dot_dimension_numbers<[1], [0], [0], [1], [0, 0, 1, 1], [], []>} : vector<8x8xf32>, vector<8x8xf32>, vector<8x8xf32> -> vector<8x8xf32>
    %36 = arith.addf %31, %35 : vector<8x8xf32>
    %37 = arith.truncf %36 : vector<8x8xf32> to vector<8x8xbf16>
    %c0_23 = arith.constant 0 : index
    %c0_24 = arith.constant 0 : index
    %c0_25 = arith.constant 0 : index
    %38 = vector.load %arg4[%c0_23, %c0_24, %c0_25] : memref<2x8x8xbf16, #tpu.memory_space<vmem>>, vector<1x8x8xbf16>
    %39 = vector.shape_cast %38 : vector<1x8x8xbf16> to vector<8x8xbf16>
    %40 = vector.shape_cast %37 : vector<8x8xbf16> to vector<1x8x8xbf16>
    tpu.vector_store %arg4[%c0_23, %c0_24, %c0_25], %40 {strides = array<i32>} : memref<2x8x8xbf16, #tpu.memory_space<vmem>>, vector<1x8x8xbf16>,
    %cst_26 = arith.constant dense<0.000000e+00> : vector<8xf32>
    %41 = vector.multi_reduction <add>, %36, %cst_26 [1] : vector<8x8xf32> to vector<8xf32>
    %42 = vector.shape_cast %41 : vector<8xf32> to vector<8x1xf32>
    %43 = arith.mulf %36, %36 : vector<8x8xf32>
    %cst_27 = arith.constant dense<0.000000e+00> : vector<8xf32>
    %44 = vector.multi_reduction <add>, %43, %cst_27 [1] : vector<8x8xf32> to vector<8xf32>
    %45 = vector.shape_cast %44 : vector<8xf32> to vector<8x1xf32>
    %46 = tpu.concatenate %42, %45 in 1 : vector<8x1xf32>, vector<8x1xf32> -> vector<8x2xf32>
    %47 = arith.addf %2, %46 : vector<8x2xf32>
    %c1_28 = arith.constant 1 : index
    %c0_29 = arith.constant 0 : index
    %c0_30 = arith.constant 0 : index
    %48 = vector.load %arg1[%c1_28, %c0_29, %c0_30] : memref<2x8x8xbf16, #tpu.memory_space<vmem>>, vector<1x8x8xbf16>
    %49 = vector.shape_cast %48 : vector<1x8x8xbf16> to vector<8x8xbf16>
    %50 = arith.extf %49 : vector<8x8xbf16> to vector<8x8xf32>
    %51 = vector.broadcast %0 : vector<8x1xf32> to vector<8x8xf32>
    %52 = arith.mulf %50, %51 : vector<8x8xf32>
    %53 = vector.broadcast %1 : vector<8x1xf32> to vector<8x8xf32>
    %54 = arith.addf %52, %53 : vector<8x8xf32>
    %cst_31 = arith.constant 0.000000e+00 : f32
    %55 = vector.broadcast %cst_31 : f32 to vector<8x8xf32>
    %56 = arith.cmpf ogt, %54, %55 : vector<8x8xf32>
    %cst_32 = arith.constant 2.000000e-01 : f32
    %57 = vector.broadcast %cst_32 : f32 to vector<8x8xf32>
    %58 = arith.mulf %57, %54 : vector<8x8xf32>
    %59 = arith.select %56, %54, %58 : vector<8x8xi1>, vector<8x8xf32>
    %cst_33 = arith.constant 0.000000e+00 : f32
    %60 = vector.broadcast %cst_33 : f32 to vector<8x1xf32>
    %cst_34 = arith.constant 0.000000e+00 : f32
    %61 = vector.broadcast %cst_34 : f32 to vector<8x2xf32>
    %62 = tpu.concatenate %60, %59, %61 in 1 : vector<8x1xf32>, vector<8x8xf32>, vector<8x2xf32> -> vector<8x11xf32>
    %c0_35 = arith.constant 0 : index
    %c0_36 = arith.constant 0 : index
    %c0_37 = arith.constant 0 : index
    %63 = vector.load %arg3[%c0_35, %c0_36, %c0_37] : memref<4x8x8xf32, #tpu.memory_space<vmem>>, vector<1x8x8xf32>
    %64 = vector.shape_cast %63 : vector<1x8x8xf32> to vector<8x8xf32>
    %65 = vector.extract_strided_slice %62 {offsets = [0, 0], sizes = [8, 8], strides = [1, 1]} : vector<8x11xf32> to vector<8x8xf32>
    %cst_38 = arith.constant dense<0.000000e+00> : vector<8x8xf32>
    %66 = tpu.matmul %64, %65, %cst_38 {dimension_numbers = #tpu.dot_dimension_numbers<[1], [0], [0], [1], [0, 0, 1, 1], [], []>} : vector<8x8xf32>, vector<8x8xf32>, vector<8x8xf32> -> vector<8x8xf32>
    %c1_39 = arith.constant 1 : index
    %c0_40 = arith.constant 0 : index
    %c0_41 = arith.constant 0 : index
    %67 = vector.load %arg3[%c1_39, %c0_40, %c0_41] : memref<4x8x8xf32, #tpu.memory_space<vmem>>, vector<1x8x8xf32>
    %68 = vector.shape_cast %67 : vector<1x8x8xf32> to vector<8x8xf32>
    %69 = vector.extract_strided_slice %62 {offsets = [0, 1], sizes = [8, 8], strides = [1, 1]} : vector<8x11xf32> to vector<8x8xf32>
    %cst_42 = arith.constant dense<0.000000e+00> : vector<8x8xf32>
    %70 = tpu.matmul %68, %69, %cst_42 {dimension_numbers = #tpu.dot_dimension_numbers<[1], [0], [0], [1], [0, 0, 1, 1], [], []>} : vector<8x8xf32>, vector<8x8xf32>, vector<8x8xf32> -> vector<8x8xf32>
    %71 = arith.addf %66, %70 : vector<8x8xf32>
    %c2_43 = arith.constant 2 : index
    %c0_44 = arith.constant 0 : index
    %c0_45 = arith.constant 0 : index
    %72 = vector.load %arg3[%c2_43, %c0_44, %c0_45] : memref<4x8x8xf32, #tpu.memory_space<vmem>>, vector<1x8x8xf32>
    %73 = vector.shape_cast %72 : vector<1x8x8xf32> to vector<8x8xf32>
    %74 = vector.extract_strided_slice %62 {offsets = [0, 2], sizes = [8, 8], strides = [1, 1]} : vector<8x11xf32> to vector<8x8xf32>
    %cst_46 = arith.constant dense<0.000000e+00> : vector<8x8xf32>
    %75 = tpu.matmul %73, %74, %cst_46 {dimension_numbers = #tpu.dot_dimension_numbers<[1], [0], [0], [1], [0, 0, 1, 1], [], []>} : vector<8x8xf32>, vector<8x8xf32>, vector<8x8xf32> -> vector<8x8xf32>
    %76 = arith.addf %71, %75 : vector<8x8xf32>
    %c3_47 = arith.constant 3 : index
    %c0_48 = arith.constant 0 : index
    %c0_49 = arith.constant 0 : index
    %77 = vector.load %arg3[%c3_47, %c0_48, %c0_49] : memref<4x8x8xf32, #tpu.memory_space<vmem>>, vector<1x8x8xf32>
    %78 = vector.shape_cast %77 : vector<1x8x8xf32> to vector<8x8xf32>
    %79 = vector.extract_strided_slice %62 {offsets = [0, 3], sizes = [8, 8], strides = [1, 1]} : vector<8x11xf32> to vector<8x8xf32>
    %cst_50 = arith.constant dense<0.000000e+00> : vector<8x8xf32>
    %80 = tpu.matmul %78, %79, %cst_50 {dimension_numbers = #tpu.dot_dimension_numbers<[1], [0], [0], [1], [0, 0, 1, 1], [], []>} : vector<8x8xf32>, vector<8x8xf32>, vector<8x8xf32> -> vector<8x8xf32>
    %81 = arith.addf %76, %80 : vector<8x8xf32>
    %82 = arith.truncf %81 : vector<8x8xf32> to vector<8x8xbf16>
    %c1_51 = arith.constant 1 : index
    %c0_52 = arith.constant 0 : index
    %c0_53 = arith.constant 0 : index
    %83 = vector.load %arg4[%c1_51, %c0_52, %c0_53] : memref<2x8x8xbf16, #tpu.memory_space<vmem>>, vector<1x8x8xbf16>
    %84 = vector.shape_cast %83 : vector<1x8x8xbf16> to vector<8x8xbf16>
    %85 = vector.shape_cast %82 : vector<8x8xbf16> to vector<1x8x8xbf16>
    tpu.vector_store %arg4[%c1_51, %c0_52, %c0_53], %85 {strides = array<i32>} : memref<2x8x8xbf16, #tpu.memory_space<vmem>>, vector<1x8x8xbf16>,
    %cst_54 = arith.constant dense<0.000000e+00> : vector<8xf32>
    %86 = vector.multi_reduction <add>, %81, %cst_54 [1] : vector<8x8xf32> to vector<8xf32>
    %87 = vector.shape_cast %86 : vector<8xf32> to vector<8x1xf32>
    %88 = arith.mulf %81, %81 : vector<8x8xf32>
    %cst_55 = arith.constant dense<0.000000e+00> : vector<8xf32>
    %89 = vector.multi_reduction <add>, %88, %cst_55 [1] : vector<8x8xf32> to vector<8xf32>
    %90 = vector.shape_cast %89 : vector<8xf32> to vector<8x1xf32>
    %91 = tpu.concatenate %87, %90 in 1 : vector<8x1xf32>, vector<8x1xf32> -> vector<8x2xf32>
    %92 = arith.addf %47, %91 : vector<8x2xf32>
    %93 = vector.shape_cast %92 : vector<8x2xf32> to vector<1x8x2xf32>
    %c0_56 = arith.constant 0 : index
    %c0_57 = arith.constant 0 : index
    %c0_58 = arith.constant 0 : index
    %94 = vector.load %arg5[%c0_56, %c0_57, %c0_58] : memref<1x8x2xf32, #tpu.memory_space<vmem>>, vector<1x8x2xf32>
    tpu.vector_store %arg5[%c0_56, %c0_57, %c0_58], %93 {strides = array<i32>} : memref<1x8x2xf32, #tpu.memory_space<vmem>>, vector<1x8x2xf32>,
    return
  }
  func.func @transform_0(%arg0: i32) -> (i32, i32, i32) {
    %c0_i32 = arith.constant 0 : i32
    %c0_i32_0 = arith.constant 0 : i32
    %c0_i32_1 = arith.constant 0 : i32
    return %arg0, %c0_i32, %c0_i32_0 : i32, i32, i32
  }
  func.func @transform_1(%arg0: i32) -> (i32, i32) {
    %c0_i32 = arith.constant 0 : i32
    %c0_i32_0 = arith.constant 0 : i32
    %c0_i32_1 = arith.constant 0 : i32
    return %c0_i32, %c0_i32_0 : i32, i32
  }
  func.func @transform_2(%arg0: i32) -> (i32, i32, i32) {
    %c0_i32 = arith.constant 0 : i32
    %c0_i32_0 = arith.constant 0 : i32
    %c0_i32_1 = arith.constant 0 : i32
    %c0_i32_2 = arith.constant 0 : i32
    return %c0_i32, %c0_i32_0, %c0_i32_1 : i32, i32, i32
  }
  func.func @transform_3(%arg0: i32) -> (i32, i32, i32) {
    %c0_i32 = arith.constant 0 : i32
    %c0_i32_0 = arith.constant 0 : i32
    %c0_i32_1 = arith.constant 0 : i32
    return %arg0, %c0_i32, %c0_i32_0 : i32, i32, i32
  }
  func.func @transform_4(%arg0: i32) -> (i32, i32, i32) {
    %c0_i32 = arith.constant 0 : i32
    %c0_i32_0 = arith.constant 0 : i32
    %c0_i32_1 = arith.constant 0 : i32
    return %arg0, %c0_i32, %c0_i32_0 : i32, i32, i32
  }
}

</mosaic_0001>

<llo_original>
// kernel: residual_block.5
$region0: #{residual_block.5}
  #allocation0 [shape = 'u32[]', space=smem, size = 0x4, offset = 0x4, fixed_abs, tag = 'smem constant byte address 0x4 - core index']
  #allocation1 [shape = 'u32[144,128]{1,0:T(1,128)}', space=vmem, size = 0x12000, scoped, tag = 'internal scratch']
  %s0 = inlined_call_operand.vmem [shape: bf16[2,8,8], index: 0, kind: input, shape index: {}]
  %s1 = inlined_call_operand.vmem [shape: bf16[2,8,8], index: 1, kind: input, shape index: {}]
  %s2 = inlined_call_operand.vmem [shape: f32[8,4], index: 2, kind: input, shape index: {}]
  %s3 = inlined_call_operand.hbm [shape: f32[2,8,8], index: 3, kind: output, shape index: {}]
  %s4 = sld [smem:[#allocation0]]
  $region22: #{residual_block.5} parent=0
    _
  %s6 = ssub.s32 1, %s4
  %s7 = scalar_select 0, %s6, %s4
  $region1: #{residual_block.5} parent=0
    #allocation2 [shape = 'u8[8192]{0}', space=vmem, size = 0x2000, scoped, tag = 'output window, operand 0, single buffered']
    #allocation3 [shape = 's32[1]{0}', space=sflag, size = 0x4, scoped, tag = 'scoped memory for residual_block.5']
    %8 = vsyncpa [#allocation3], 0
    // Predicated region
    $region2: #{residual_block.5} parent=1 // pred_check
      _
    $region3: #{residual_block.5} parent=1 // pred_check_branch
      %10 = sbr.rel (0) target = $region5
    $region4: #{residual_block.5} parent=1 // pred_region
      _
    $region5: #{residual_block.5} parent=1 // pred_fallthru
      _
    // Predicated region
    $region6: #{residual_block.5} parent=1 // pred_check
      _
    $region7: #{residual_block.5} parent=1 // pred_check_branch
      %12 = sbr.rel (0) target = $region9
    $region8: #{residual_block.5} parent=1 // pred_region
      _
    $region9: #{residual_block.5} parent=1 // pred_fallthru
      _
    // Predicated region
    $region10: #{residual_block.5} parent=1 // pred_check
      _
    $region11: #{residual_block.5} parent=1 // pred_check_branch
      %14 = sbr.rel (0) target = $region13
    $region12: #{residual_block.5} parent=1 // pred_region
      _
    $region13: #{residual_block.5} parent=1 // pred_fallthru
      _
    %v15 = vld [vmem:[%s2] sm:$0xff]
    %v16 = vld [vmem:[%s0] sm:$0xf]
    %v17 = vld [vmem:[%s0 + $0x4] sm:$0xf]
    %v18 = vunpack.c.l.bf16 %v16
    %v19 = vunpack.c.l.bf16 %v17
    %21 = vset.pattern.permute.xlu0 0
    %22 = vperm.xlu0 %21, %v15
    %v23 = vpop.permute.xlu0 %22
    %v25 = vmul.f32 %v18, %v23
    %v26 = vmul.f32 %v19, %v23
    %27 = vset.pattern.permute.xlu0 1
    %28 = vperm.xlu0 %27, %v15
    %v29 = vpop.permute.xlu0 %28
    %v31 = vadd.f32 %v25, %v29
    %v32 = vadd.f32 %v26, %v29
    %v33 = vld [vmem:[%s1] sm:$0xf]
    %v34 = vld [vmem:[%s1 + $0x4] sm:$0xf]
    %v35 = vunpack.c.l.bf16 %v33
    %v36 = vunpack.c.l.bf16 %v34
    %37 = vset.pattern.permute.xlu0 2
    %38 = vperm.xlu0 %37, %v15
    %v39 = vpop.permute.xlu0 %38
    %v41 = vmul.f32 %v35, %v39
    %v42 = vmul.f32 %v36, %v39
    %v43 = vadd.f32 %v31, %v41
    %v44 = vadd.f32 %v32, %v42
    %45 = vset.pattern.permute.xlu0 3
    %46 = vperm.xlu0 %45, %v15
    %v47 = vpop.permute.xlu0 %46
    %v49 = vadd.f32 %v43, %v47
    %v50 = vadd.f32 %v44, %v47
    %vm51 = vcmp.gt.f32.partialorder %v49, 0.0
    %vm52 = vcmp.gt.f32.partialorder %v50, 0.0
    %v53 = vmul.f32 %v49, 0.2
    %v54 = vmul.f32 %v50, 0.2
    %v55 = vsel %vm51, %v49, %v53
    %v56 = vsel %vm52, %v50, %v54
    %vm57 = vcmask 64512
    %58 = vst.msk [vmem:[#allocation2] sm:$0xff] %vm57, %v55
    %59 = vst.msk [vmem:[#allocation2 + $0x8] sm:$0xff] %vm57, %v56
    // Predicated region
    $region14: #{residual_block.5} parent=1 // pred_check
      _
    $region15: #{residual_block.5} parent=1 // pred_check_branch
      %61 = sbr.rel (0) target = $region17
    $region16: #{residual_block.5} parent=1 // pred_region
      %s63 = ssub.s32 256, 256
      %64 = vsyncadd [#allocation3], %s63
      %s65 = sshll.u32 [#allocation2], 4
      %s66 = int_to_ptr.vmem [resolvable:$true] %s65
      %71 = dma.vmem_to_hbm [thread:$0]  %s66, 256, %s3, [#allocation3], 128, 128, 8
    $region17: #{residual_block.5} parent=1 // pred_fallthru
      _
    // Predicated region
    $region18: #{residual_block.5} parent=1 // pred_check
      _
    $region19: #{residual_block.5} parent=1 // pred_check_branch
      %73 = sbr.rel (0) target = $region21
    $region20: #{residual_block.5} parent=1 // pred_region
      %74 = dma.done [#allocation3], 256
    $region21: #{residual_block.5} parent=1 // pred_fallthru
      _
    %75 = vsyncpa [#allocation3], 1

// kernel: residual_block.3
$region0: #{residual_block.3}
  #allocation0 [shape = 'u32[]', space=smem, size = 0x4, offset = 0x4, fixed_abs, tag = 'smem constant byte address 0x4 - core index']
  #allocation1 [shape = 'u32[144,128]{1,0:T(1,128)}', space=vmem, size = 0x12000, scoped, tag = 'internal scratch']
  %s0 = inlined_call_operand.vmem [shape: f32[2,4,9], index: 0, kind: input, shape index: {}]
  %s1 = inlined_call_operand.vmem [shape: f32[2,4,9], index: 1, kind: input, shape index: {}]
  %s2 = inlined_call_operand.vmem [shape: f32[4,16,4], index: 2, kind: input, shape index: {}]
  %s3 = inlined_call_operand.vmem [shape: bf16[2,8,8], index: 3, kind: output, shape index: {0}]
  %s4 = inlined_call_operand.vmem [shape: bf16[2,8,8], index: 4, kind: output, shape index: {1}]
  %s5 = inlined_call_operand.vmem [shape: f32[1,16,2], index: 5, kind: output, shape index: {2}]
  %6 = xla_tuple %s3, %s4, %s5
  %s7 = sld [smem:[#allocation0]]
  $region38: #{residual_block.3} parent=0
    _
  %s9 = ssub.s32 1, %s7
  %s10 = scalar_select 0, %s9, %s7
  // Predicated region
  $region2: #{residual_block.3} parent=0 // pred_check
    _
  $region3: #{residual_block.3} parent=0 // pred_check_branch
    %12 = sbr.rel (0) target = $region5
  $region4: #{residual_block.3} parent=0 // pred_region
    _
  $region5: #{residual_block.3} parent=0 // pred_fallthru
    _
  // Predicated region
  $region6: #{residual_block.3} parent=0 // pred_check
    _
  $region7: #{residual_block.3} parent=0 // pred_check_branch
    %14 = sbr.rel (0) target = $region9
  $region8: #{residual_block.3} parent=0 // pred_region
    _
  $region9: #{residual_block.3} parent=0 // pred_fallthru
    _
  // Predicated region
  $region10: #{residual_block.3} parent=0 // pred_check
    _
  $region11: #{residual_block.3} parent=0 // pred_check_branch
    %16 = sbr.rel (0) target = $region13
  $region12: #{residual_block.3} parent=0 // pred_region
    _
  $region13: #{residual_block.3} parent=0 // pred_fallthru
    _
  %v17 = vld [vmem:[%s0] sm:$0xf]
  %v18 = vld [vmem:[%s1] sm:$0xf]
  %v19 = vld [vmem:[%s2] sm:$0xff]
  %v20 = vld [vmem:[%s2 + $0x8] sm:$0xff]
  %s21 = scalar_lea.vmem %s2, 16
  %v22 = vld [vmem:[%s21] sm:$0xff]
  %v23 = vld [vmem:[%s21 + $0x8] sm:$0xff]
  %vm24 = vcmask 31744
  %v26 = vsel %vm24, %v22, 0
  %v29 = vsel %vm24, %v23, 0
  %vm31 = vcmask 1043456
  %v33 = vsel %vm31, %v18, 0
  %35 = vmatprep.subr.mxu0 0.0
  %36 = vmatpush1.msra.mxu0 %v33
  %37 = vmatprep.subr.mxu0 0.0
  %38 = vmatpush1.msra.mxu0 0.0
  %39 = vmatprep.subr.mxu0 0.0
  %40 = vmatpush1.msra.mxu0 0.0
  %41 = vmatprep.subr.mxu0 0.0
  %42 = vmatpush1.msra.mxu0 0.0
  %43 = vmatprep.subr.mxu0 0.0
  %44 = vmatpush1.msra.mxu0 0.0
  %45 = vmatprep.subr.mxu0 0.0
  %46 = vmatpush1.msra.mxu0 0.0
  %47 = vmatprep.subr.mxu0 0.0
  %48 = vmatpush1.msra.mxu0 0.0
  %49 = vmatprep.subr.mxu0 0.0
  %50 = vmatpush1.msra.mxu0 0.0
  %51 = vmatprep.subr.mxu0 0.0
  %52 = vmatpush1.msra.mxu0 0.0
  %53 = vmatprep.subr.mxu0 0.0
  %54 = vmatpush1.msra.mxu0 0.0
  %55 = vmatprep.subr.mxu0 0.0
  %56 = vmatpush1.msra.mxu0 0.0
  %57 = vmatprep.subr.mxu0 0.0
  %58 = vmatpush1.msra.mxu0 0.0
  %59 = vmatprep.subr.mxu0 0.0
  %60 = vmatpush1.msra.mxu0 0.0
  %61 = vmatprep.subr.mxu0 0.0
  %62 = vmatpush1.msra.mxu0 0.0
  %63 = vmatprep.subr.mxu0 0.0
  %64 = vmatpush1.msra.mxu0 0.0
  %65 = vmatprep.subr.mxu0 0.0
  %66 = vmatpush1.msra.mxu0 0.0
  %67 = vmatprep.subr.mxu0 0.0
  %68 = vmatpush1.msra.mxu0 0.0
  %69 = vmatprep.subr.mxu0 0.0
  %70 = vmatpush1.msra.mxu0 0.0
  %71 = vmatprep.subr.mxu0 0.0
  %72 = vmatpush1.msra.mxu0 0.0
  %73 = vmatprep.subr.mxu0 0.0
  %74 = vmatpush1.msra.mxu0 0.0
  %75 = vmatprep.subr.mxu0 0.0
  %76 = vmatpush1.msra.mxu0 0.0
  %77 = vmatprep.subr.mxu0 0.0
  %78 = vmatpush1.msra.mxu0 0.0
  %79 = vmatprep.subr.mxu0 0.0
  %80 = vmatpush1.msra.mxu0 0.0
  %81 = vmatprep.subr.mxu0 0.0
  %82 = vmatpush1.msra.mxu0 0.0
  %83 = vmatprep.subr.mxu0 0.0
  %84 = vmatpush1.msra.mxu0 0.0
  %85 = vmatprep.subr.mxu0 0.0
  %86 = vmatpush1.msra.mxu0 0.0
  %87 = vmatprep.subr.mxu0 0.0
  %88 = vmatpush1.msra.mxu0 0.0
  %89 = vmatprep.subr.mxu0 0.0
  %90 = vmatpush1.msra.mxu0 0.0
  %91 = vmatprep.subr.mxu0 0.0
  %92 = vmatpush1.msra.mxu0 0.0
  %93 = vmatprep.subr.mxu0 0.0
  %94 = vmatpush1.msra.mxu0 0.0
  %95 = vmatprep.subr.mxu0 0.0
  %96 = vmatpush1.msra.mxu0 0.0
  %97 = vmatprep.subr.mxu0 0.0
  %98 = vmatpush1.msra.mxu0 0.0
  %99 = vmatprep.mubr.f32.mxu0 0.0
  %100 = vmatmul.mubr.f32.gmra.mrb[0].mxu0 %v26
  %v101 = vpop.f32.mrb[0].mxu0
  %v102 = vadd.f32 0.0, %v101
  %v103 = vpop.f32.mrb[0].mxu0
  %104 = vmatprep.mubr.f32.mxu0 0.0
  %105 = vmatmul.mubr.f32.gmra.mrb[0].mxu0 %v29
  %v106 = vpop.f32.mrb[0].mxu0
  %v107 = vadd.f32 0.0, %v106
  %v108 = vpop.f32.mrb[0].mxu0
  %109 = vdwg.mxu0
  %v111 = vsel %vm24, %v19, 0
  %v114 = vsel %vm24, %v20, 0
  %v117 = vsel %vm31, %v17, 0
  %119 = vmatprep.subr.mxu0 0.0
  %120 = vmatpush1.msra.mxu0 %v117
  %121 = vmatprep.subr.mxu0 0.0
  %122 = vmatpush1.msra.mxu0 0.0
  %123 = vmatprep.subr.mxu0 0.0
  %124 = vmatpush1.msra.mxu0 0.0
  %125 = vmatprep.subr.mxu0 0.0
  %126 = vmatpush1.msra.mxu0 0.0
  %127 = vmatprep.subr.mxu0 0.0
  %128 = vmatpush1.msra.mxu0 0.0
  %129 = vmatprep.subr.mxu0 0.0
  %130 = vmatpush1.msra.mxu0 0.0
  %131 = vmatprep.subr.mxu0 0.0
  %132 = vmatpush1.msra.mxu0 0.0
  %133 = vmatprep.subr.mxu0 0.0
  %134 = vmatpush1.msra.mxu0 0.0
  %135 = vmatprep.subr.mxu0 0.0
  %136 = vmatpush1.msra.mxu0 0.0
  %137 = vmatprep.subr.mxu0 0.0
  %138 = vmatpush1.msra.mxu0 0.0
  %139 = vmatprep.subr.mxu0 0.0
  %140 = vmatpush1.msra.mxu0 0.0
  %141 = vmatprep.subr.mxu0 0.0
  %142 = vmatpush1.msra.mxu0 0.0
  %143 = vmatprep.subr.mxu0 0.0
  %144 = vmatpush1.msra.mxu0 0.0
  %145 = vmatprep.subr.mxu0 0.0
  %146 = vmatpush1.msra.mxu0 0.0
  %147 = vmatprep.subr.mxu0 0.0
  %148 = vmatpush1.msra.mxu0 0.0
  %149 = vmatprep.subr.mxu0 0.0
  %150 = vmatpush1.msra.mxu0 0.0
  %151 = vmatprep.subr.mxu0 0.0
  %152 = vmatpush1.msra.mxu0 0.0
  %153 = vmatprep.subr.mxu0 0.0
  %154 = vmatpush1.msra.mxu0 0.0
  %155 = vmatprep.subr.mxu0 0.0
  %156 = vmatpush1.msra.mxu0 0.0
  %157 = vmatprep.subr.mxu0 0.0
  %158 = vmatpush1.msra.mxu0 0.0
  %159 = vmatprep.subr.mxu0 0.0
  %160 = vmatpush1.msra.mxu0 0.0
  %161 = vmatprep.subr.mxu0 0.0
  %162 = vmatpush1.msra.mxu0 0.0
  %163 = vmatprep.subr.mxu0 0.0
  %164 = vmatpush1.msra.mxu0 0.0
  %165 = vmatprep.subr.mxu0 0.0
  %166 = vmatpush1.msra.mxu0 0.0
  %167 = vmatprep.subr.mxu0 0.0
  %168 = vmatpush1.msra.mxu0 0.0
  %169 = vmatprep.subr.mxu0 0.0
  %170 = vmatpush1.msra.mxu0 0.0
  %171 = vmatprep.subr.mxu0 0.0
  %172 = vmatpush1.msra.mxu0 0.0
  %173 = vmatprep.subr.mxu0 0.0
  %174 = vmatpush1.msra.mxu0 0.0
  %175 = vmatprep.subr.mxu0 0.0
  %176 = vmatpush1.msra.mxu0 0.0
  %177 = vmatprep.subr.mxu0 0.0
  %178 = vmatpush1.msra.mxu0 0.0
  %179 = vmatprep.subr.mxu0 0.0
  %180 = vmatpush1.msra.mxu0 0.0
  %181 = vmatprep.subr.mxu0 0.0
  %182 = vmatpush1.msra.mxu0 0.0
  %183 = vmatprep.mubr.f32.mxu0 0.0
  %184 = vmatmul.mubr.f32.gmra.mrb[0].mxu0 %v111
  %v185 = vpop.f32.mrb[0].mxu0
  %v186 = vadd.f32 %v102, %v185
  %v187 = vpop.f32.mrb[0].mxu0
  %188 = vmatprep.mubr.f32.mxu0 0.0
  %189 = vmatmul.mubr.f32.gmra.mrb[0].mxu0 %v114
  %v190 = vpop.f32.mrb[0].mxu0
  %v191 = vadd.f32 %v107, %v190
  %v192 = vpop.f32.mrb[0].mxu0
  %193 = vdwg.mxu0
  %s194 = scalar_lea.vmem %s2, 32
  %v195 = vld [vmem:[%s194] sm:$0xff]
  %v196 = vld [vmem:[%s194 + $0x8] sm:$0xff]
  %197 = vrot.lane.b32.xlu0 %v17, 127
  %v198 = vpop.permute.xlu0 %197
  %v200 = vsel %vm24, %v195, 0
  %v203 = vsel %vm24, %v196, 0
  %v205 = vsel %vm31, %v198, 0
  %207 = vmatprep.subr.mxu0 0.0
  %208 = vmatpush1.msra.mxu0 %v205
  %209 = vmatprep.subr.mxu0 0.0
  %210 = vmatpush1.msra.mxu0 0.0
  %211 = vmatprep.subr.mxu0 0.0
  %212 = vmatpush1.msra.mxu0 0.0
  %213 = vmatprep.subr.mxu0 0.0
  %214 = vmatpush1.msra.mxu0 0.0
  %215 = vmatprep.subr.mxu0 0.0
  %216 = vmatpush1.msra.mxu0 0.0
  %217 = vmatprep.subr.mxu0 0.0
  %218 = vmatpush1.msra.mxu0 0.0
  %219 = vmatprep.subr.mxu0 0.0
  %220 = vmatpush1.msra.mxu0 0.0
  %221 = vmatprep.subr.mxu0 0.0
  %222 = vmatpush1.msra.mxu0 0.0
  %223 = vmatprep.subr.mxu0 0.0
  %224 = vmatpush1.msra.mxu0 0.0
  %225 = vmatprep.subr.mxu0 0.0
  %226 = vmatpush1.msra.mxu0 0.0
  %227 = vmatprep.subr.mxu0 0.0
  %228 = vmatpush1.msra.mxu0 0.0
  %229 = vmatprep.subr.mxu0 0.0
  %230 = vmatpush1.msra.mxu0 0.0
  %231 = vmatprep.subr.mxu0 0.0
  %232 = vmatpush1.msra.mxu0 0.0
  %233 = vmatprep.subr.mxu0 0.0
  %234 = vmatpush1.msra.mxu0 0.0
  %235 = vmatprep.subr.mxu0 0.0
  %236 = vmatpush1.msra.mxu0 0.0
  %237 = vmatprep.subr.mxu0 0.0
  %238 = vmatpush1.msra.mxu0 0.0
  %239 = vmatprep.subr.mxu0 0.0
  %240 = vmatpush1.msra.mxu0 0.0
  %241 = vmatprep.subr.mxu0 0.0
  %242 = vmatpush1.msra.mxu0 0.0
  %243 = vmatprep.subr.mxu0 0.0
  %244 = vmatpush1.msra.mxu0 0.0
  %245 = vmatprep.subr.mxu0 0.0
  %246 = vmatpush1.msra.mxu0 0.0
  %247 = vmatprep.subr.mxu0 0.0
  %248 = vmatpush1.msra.mxu0 0.0
  %249 = vmatprep.subr.mxu0 0.0
  %250 = vmatpush1.msra.mxu0 0.0
  %251 = vmatprep.subr.mxu0 0.0
  %252 = vmatpush1.msra.mxu0 0.0
  %253 = vmatprep.subr.mxu0 0.0
  %254 = vmatpush1.msra.mxu0 0.0
  %255 = vmatprep.subr.mxu0 0.0
  %256 = vmatpush1.msra.mxu0 0.0
  %257 = vmatprep.subr.mxu0 0.0
  %258 = vmatpush1.msra.mxu0 0.0
  %259 = vmatprep.subr.mxu0 0.0
  %260 = vmatpush1.msra.mxu0 0.0
  %261 = vmatprep.subr.mxu0 0.0
  %262 = vmatpush1.msra.mxu0 0.0
  %263 = vmatprep.subr.mxu0 0.0
  %264 = vmatpush1.msra.mxu0 0.0
  %265 = vmatprep.subr.mxu0 0.0
  %266 = vmatpush1.msra.mxu0 0.0
  %267 = vmatprep.subr.mxu0 0.0
  %268 = vmatpush1.msra.mxu0 0.0
  %269 = vmatprep.subr.mxu0 0.0
  %270 = vmatpush1.msra.mxu0 0.0
  %271 = vmatprep.mubr.f32.mxu0 0.0
  %272 = vmatmul.mubr.f32.gmra.mrb[0].mxu0 %v200
  %v273 = vpop.f32.mrb[0].mxu0
  %v274 = vadd.f32 0.0, %v273
  %v275 = vpop.f32.mrb[0].mxu0
  %276 = vmatprep.mubr.f32.mxu0 0.0
  %277 = vmatmul.mubr.f32.gmra.mrb[0].mxu0 %v203
  %v278 = vpop.f32.mrb[0].mxu0
  %v279 = vadd.f32 0.0, %v278
  %v280 = vpop.f32.mrb[0].mxu0
  %281 = vdwg.mxu0
  %v282 = vadd.f32 %v186, %v274
  %v283 = vadd.f32 %v191, %v279
  %s284 = scalar_lea.vmem %s2, 48
  %v285 = vld [vmem:[%s284] sm:$0xff]
  %v286 = vld [vmem:[%s284 + $0x8] sm:$0xff]
  %287 = vrot.lane.b32.xlu0 %v18, 127
  %v288 = vpop.permute.xlu0 %287
  %v290 = vsel %vm24, %v285, 0
  %v293 = vsel %vm24, %v286, 0
  %v295 = vsel %vm31, %v288, 0
  %297 = vmatprep.subr.mxu0 0.0
  %298 = vmatpush1.msra.mxu0 %v295
  %299 = vmatprep.subr.mxu0 0.0
  %300 = vmatpush1.msra.mxu0 0.0
  %301 = vmatprep.subr.mxu0 0.0
  %302 = vmatpush1.msra.mxu0 0.0
  %303 = vmatprep.subr.mxu0 0.0
  %304 = vmatpush1.msra.mxu0 0.0
  %305 = vmatprep.subr.mxu0 0.0
  %306 = vmatpush1.msra.mxu0 0.0
  %307 = vmatprep.subr.mxu0 0.0
  %308 = vmatpush1.msra.mxu0 0.0
  %309 = vmatprep.subr.mxu0 0.0
  %310 = vmatpush1.msra.mxu0 0.0
  %311 = vmatprep.subr.mxu0 0.0
  %312 = vmatpush1.msra.mxu0 0.0
  %313 = vmatprep.subr.mxu0 0.0
  %314 = vmatpush1.msra.mxu0 0.0
  %315 = vmatprep.subr.mxu0 0.0
  %316 = vmatpush1.msra.mxu0 0.0
  %317 = vmatprep.subr.mxu0 0.0
  %318 = vmatpush1.msra.mxu0 0.0
  %319 = vmatprep.subr.mxu0 0.0
  %320 = vmatpush1.msra.mxu0 0.0
  %321 = vmatprep.subr.mxu0 0.0
  %322 = vmatpush1.msra.mxu0 0.0
  %323 = vmatprep.subr.mxu0 0.0
  %324 = vmatpush1.msra.mxu0 0.0
  %325 = vmatprep.subr.mxu0 0.0
  %326 = vmatpush1.msra.mxu0 0.0
  %327 = vmatprep.subr.mxu0 0.0
  %328 = vmatpush1.msra.mxu0 0.0
  %329 = vmatprep.subr.mxu0 0.0
  %330 = vmatpush1.msra.mxu0 0.0
  %331 = vmatprep.subr.mxu0 0.0
  %332 = vmatpush1.msra.mxu0 0.0
  %333 = vmatprep.subr.mxu0 0.0
  %334 = vmatpush1.msra.mxu0 0.0
  %335 = vmatprep.subr.mxu0 0.0
  %336 = vmatpush1.msra.mxu0 0.0
  %337 = vmatprep.subr.mxu0 0.0
  %338 = vmatpush1.msra.mxu0 0.0
  %339 = vmatprep.subr.mxu0 0.0
  %340 = vmatpush1.msra.mxu0 0.0
  %341 = vmatprep.subr.mxu0 0.0
  %342 = vmatpush1.msra.mxu0 0.0
  %343 = vmatprep.subr.mxu0 0.0
  %344 = vmatpush1.msra.mxu0 0.0
  %345 = vmatprep.subr.mxu0 0.0
  %346 = vmatpush1.msra.mxu0 0.0
  %347 = vmatprep.subr.mxu0 0.0
  %348 = vmatpush1.msra.mxu0 0.0
  %349 = vmatprep.subr.mxu0 0.0
  %350 = vmatpush1.msra.mxu0 0.0
  %351 = vmatprep.subr.mxu0 0.0
  %352 = vmatpush1.msra.mxu0 0.0
  %353 = vmatprep.subr.mxu0 0.0
  %354 = vmatpush1.msra.mxu0 0.0
  %355 = vmatprep.subr.mxu0 0.0
  %356 = vmatpush1.msra.mxu0 0.0
  %357 = vmatprep.subr.mxu0 0.0
  %358 = vmatpush1.msra.mxu0 0.0
  %359 = vmatprep.subr.mxu0 0.0
  %360 = vmatpush1.msra.mxu0 0.0
  %361 = vmatprep.mubr.f32.mxu0 0.0
  %362 = vmatmul.mubr.f32.gmra.mrb[0].mxu0 %v290
  %v363 = vpop.f32.mrb[0].mxu0
  %v364 = vadd.f32 0.0, %v363
  %v365 = vpop.f32.mrb[0].mxu0
  %366 = vmatprep.mubr.f32.mxu0 0.0
  %367 = vmatmul.mubr.f32.gmra.mrb[0].mxu0 %v293
  %v368 = vpop.f32.mrb[0].mxu0
  %v369 = vadd.f32 0.0, %v368
  %v370 = vpop.f32.mrb[0].mxu0
  %371 = vdwg.mxu0
  %v372 = vadd.f32 %v282, %v364
  %v373 = vadd.f32 %v283, %v369
  %v374 = vpack.c.bf16 %v372, %v372
  %vm375 = vcmask 60416
  %376 = vst.msk [vmem:[%s3] sm:$0xf] %vm375, %v374
  %v377 = vpack.c.bf16 %v373, %v373
  %378 = vst.msk [vmem:[%s4] sm:$0xf] %vm375, %v377
  %vm379 = vcmask 64512
  %v380 = vsel %vm379, %v372, 0.0
  %381 = vadd.xlane.f32.xlu0 %v380
  %v382 = vpop.xlane.xlu0 %381
  %v383 = vsel %vm379, %v373, 0.0
  %384 = vadd.xlane.f32.xlu0 %v383
  %v385 = vpop.xlane.xlu0 %384
  %v386 = vmul.f32 %v372, %v372
  %v387 = vmul.f32 %v373, %v373
  %v388 = vsel %vm379, %v386, 0.0
  %389 = vadd.xlane.f32.xlu0 %v388
  %v390 = vpop.xlane.xlu0 %389
  %v391 = vsel %vm379, %v387, 0.0
  %392 = vadd.xlane.f32.xlu0 %v391
  %v393 = vpop.xlane.xlu0 %392
  %vm394 = vcmask 7168
  %v395 = vsel %vm394, %v382, %v390
  %v396 = vsel %vm394, %v385, %v393
  %v397 = vadd.f32 %v395, 0.0
  %v398 = vadd.f32 %v396, 0.0
  %s399 = scalar_lea.vmem %s0, 4
  %v400 = vld [vmem:[%s399] sm:$0xf]
  %s401 = scalar_lea.vmem %s1, 4
  %v402 = vld [vmem:[%s401] sm:$0xf]
  %v403 = vld [vmem:[%s2] sm:$0xff]
  %v404 = vld [vmem:[%s2 + $0x8] sm:$0xff]
  %v405 = vld [vmem:[%s21] sm:$0xff]
  %v406 = vld [vmem:[%s21 + $0x8] sm:$0xff]
  %v408 = vsel %vm24, %v405, 0
  %v411 = vsel %vm24, %v406, 0
  %v414 = vsel %vm31, %v402, 0
  %416 = vmatprep.subr.mxu0 0.0
  %417 = vmatpush1.msra.mxu0 %v414
  %418 = vmatprep.subr.mxu0 0.0
  %419 = vmatpush1.msra.mxu0 0.0
  %420 = vmatprep.subr.mxu0 0.0
  %421 = vmatpush1.msra.mxu0 0.0
  %422 = vmatprep.subr.mxu0 0.0
  %423 = vmatpush1.msra.mxu0 0.0
  %424 = vmatprep.subr.mxu0 0.0
  %425 = vmatpush1.msra.mxu0 0.0
  %426 = vmatprep.subr.mxu0 0.0
  %427 = vmatpush1.msra.mxu0 0.0
  %428 = vmatprep.subr.mxu0 0.0
  %429 = vmatpush1.msra.mxu0 0.0
  %430 = vmatprep.subr.mxu0 0.0
  %431 = vmatpush1.msra.mxu0 0.0
  %432 = vmatprep.subr.mxu0 0.0
  %433 = vmatpush1.msra.mxu0 0.0
  %434 = vmatprep.subr.mxu0 0.0
  %435 = vmatpush1.msra.mxu0 0.0
  %436 = vmatprep.subr.mxu0 0.0
  %437 = vmatpush1.msra.mxu0 0.0
  %438 = vmatprep.subr.mxu0 0.0
  %439 = vmatpush1.msra.mxu0 0.0
  %440 = vmatprep.subr.mxu0 0.0
  %441 = vmatpush1.msra.mxu0 0.0
  %442 = vmatprep.subr.mxu0 0.0
  %443 = vmatpush1.msra.mxu0 0.0
  %444 = vmatprep.subr.mxu0 0.0
  %445 = vmatpush1.msra.mxu0 0.0
  %446 = vmatprep.subr.mxu0 0.0
  %447 = vmatpush1.msra.mxu0 0.0
  %448 = vmatprep.subr.mxu0 0.0
  %449 = vmatpush1.msra.mxu0 0.0
  %450 = vmatprep.subr.mxu0 0.0
  %451 = vmatpush1.msra.mxu0 0.0
  %452 = vmatprep.subr.mxu0 0.0
  %453 = vmatpush1.msra.mxu0 0.0
  %454 = vmatprep.subr.mxu0 0.0
  %455 = vmatpush1.msra.mxu0 0.0
  %456 = vmatprep.subr.mxu0 0.0
  %457 = vmatpush1.msra.mxu0 0.0
  %458 = vmatprep.subr.mxu0 0.0
  %459 = vmatpush1.msra.mxu0 0.0
  %460 = vmatprep.subr.mxu0 0.0
  %461 = vmatpush1.msra.mxu0 0.0
  %462 = vmatprep.subr.mxu0 0.0
  %463 = vmatpush1.msra.mxu0 0.0
  %464 = vmatprep.subr.mxu0 0.0
  %465 = vmatpush1.msra.mxu0 0.0
  %466 = vmatprep.subr.mxu0 0.0
  %467 = vmatpush1.msra.mxu0 0.0
  %468 = vmatprep.subr.mxu0 0.0
  %469 = vmatpush1.msra.mxu0 0.0
  %470 = vmatprep.subr.mxu0 0.0
  %471 = vmatpush1.msra.mxu0 0.0
  %472 = vmatprep.subr.mxu0 0.0
  %473 = vmatpush1.msra.mxu0 0.0
  %474 = vmatprep.subr.mxu0 0.0
  %475 = vmatpush1.msra.mxu0 0.0
  %476 = vmatprep.subr.mxu0 0.0
  %477 = vmatpush1.msra.mxu0 0.0
  %478 = vmatprep.subr.mxu0 0.0
  %479 = vmatpush1.msra.mxu0 0.0
  %480 = vmatprep.mubr.f32.mxu0 0.0
  %481 = vmatmul.mubr.f32.gmra.mrb[0].mxu0 %v408
  %v482 = vpop.f32.mrb[0].mxu0
  %v483 = vadd.f32 0.0, %v482
  %v484 = vpop.f32.mrb[0].mxu0
  %485 = vmatprep.mubr.f32.mxu0 0.0
  %486 = vmatmul.mubr.f32.gmra.mrb[0].mxu0 %v411
  %v487 = vpop.f32.mrb[0].mxu0
  %v488 = vadd.f32 0.0, %v487
  %v489 = vpop.f32.mrb[0].mxu0
  %490 = vdwg.mxu0
  %v492 = vsel %vm24, %v403, 0
  %v495 = vsel %vm24, %v404, 0
  %v498 = vsel %vm31, %v400, 0
  %500 = vmatprep.subr.mxu0 0.0
  %501 = vmatpush1.msra.mxu0 %v498
  %502 = vmatprep.subr.mxu0 0.0
  %503 = vmatpush1.msra.mxu0 0.0
  %504 = vmatprep.subr.mxu0 0.0
  %505 = vmatpush1.msra.mxu0 0.0
  %506 = vmatprep.subr.mxu0 0.0
  %507 = vmatpush1.msra.mxu0 0.0
  %508 = vmatprep.subr.mxu0 0.0
  %509 = vmatpush1.msra.mxu0 0.0
  %510 = vmatprep.subr.mxu0 0.0
  %511 = vmatpush1.msra.mxu0 0.0
  %512 = vmatprep.subr.mxu0 0.0
  %513 = vmatpush1.msra.mxu0 0.0
  %514 = vmatprep.subr.mxu0 0.0
  %515 = vmatpush1.msra.mxu0 0.0
  %516 = vmatprep.subr.mxu0 0.0
  %517 = vmatpush1.msra.mxu0 0.0
  %518 = vmatprep.subr.mxu0 0.0
  %519 = vmatpush1.msra.mxu0 0.0
  %520 = vmatprep.subr.mxu0 0.0
  %521 = vmatpush1.msra.mxu0 0.0
  %522 = vmatprep.subr.mxu0 0.0
  %523 = vmatpush1.msra.mxu0 0.0
  %524 = vmatprep.subr.mxu0 0.0
  %525 = vmatpush1.msra.mxu0 0.0
  %526 = vmatprep.subr.mxu0 0.0
  %527 = vmatpush1.msra.mxu0 0.0
  %528 = vmatprep.subr.mxu0 0.0
  %529 = vmatpush1.msra.mxu0 0.0
  %530 = vmatprep.subr.mxu0 0.0
  %531 = vmatpush1.msra.mxu0 0.0
  %532 = vmatprep.subr.mxu0 0.0
  %533 = vmatpush1.msra.mxu0 0.0
  %534 = vmatprep.subr.mxu0 0.0
  %535 = vmatpush1.msra.mxu0 0.0
  %536 = vmatprep.subr.mxu0 0.0
  %537 = vmatpush1.msra.mxu0 0.0
  %538 = vmatprep.subr.mxu0 0.0
  %539 = vmatpush1.msra.mxu0 0.0
  %540 = vmatprep.subr.mxu0 0.0
  %541 = vmatpush1.msra.mxu0 0.0
  %542 = vmatprep.subr.mxu0 0.0
  %543 = vmatpush1.msra.mxu0 0.0
  %544 = vmatprep.subr.mxu0 0.0
  %545 = vmatpush1.msra.mxu0 0.0
  %546 = vmatprep.subr.mxu0 0.0
  %547 = vmatpush1.msra.mxu0 0.0
  %548 = vmatprep.subr.mxu0 0.0
  %549 = vmatpush1.msra.mxu0 0.0
  %550 = vmatprep.subr.mxu0 0.0
  %551 = vmatpush1.msra.mxu0 0.0
  %552 = vmatprep.subr.mxu0 0.0
  %553 = vmatpush1.msra.mxu0 0.0
  %554 = vmatprep.subr.mxu0 0.0
  %555 = vmatpush1.msra.mxu0 0.0
  %556 = vmatprep.subr.mxu0 0.0
  %557 = vmatpush1.msra.mxu0 0.0
  %558 = vmatprep.subr.mxu0 0.0
  %559 = vmatpush1.msra.mxu0 0.0
  %560 = vmatprep.subr.mxu0 0.0
  %561 = vmatpush1.msra.mxu0 0.0
  %562 = vmatprep.subr.mxu0 0.0
  %563 = vmatpush1.msra.mxu0 0.0
  %564 = vmatprep.mubr.f32.mxu0 0.0
  %565 = vmatmul.mubr.f32.gmra.mrb[0].mxu0 %v492
  %v566 = vpop.f32.mrb[0].mxu0
  %v567 = vadd.f32 %v483, %v566
  %v568 = vpop.f32.mrb[0].mxu0
  %569 = vmatprep.mubr.f32.mxu0 0.0
  %570 = vmatmul.mubr.f32.gmra.mrb[0].mxu0 %v495
  %v571 = vpop.f32.mrb[0].mxu0
  %v572 = vadd.f32 %v488, %v571
  %v573 = vpop.f32.mrb[0].mxu0
  %574 = vdwg.mxu0
  %v575 = vld [vmem:[%s194] sm:$0xff]
  %v576 = vld [vmem:[%s194 + $0x8] sm:$0xff]
  %577 = vrot.lane.b32.xlu0 %v400, 127
  %v578 = vpop.permute.xlu0 %577
  %v580 = vsel %vm24, %v575, 0
  %v583 = vsel %vm24, %v576, 0
  %v585 = vsel %vm31, %v578, 0
  %587 = vmatprep.subr.mxu0 0.0
  %588 = vmatpush1.msra.mxu0 %v585
  %589 = vmatprep.subr.mxu0 0.0
  %590 = vmatpush1.msra.mxu0 0.0
  %591 = vmatprep.subr.mxu0 0.0
  %592 = vmatpush1.msra.mxu0 0.0
  %593 = vmatprep.subr.mxu0 0.0
  %594 = vmatpush1.msra.mxu0 0.0
  %595 = vmatprep.subr.mxu0 0.0
  %596 = vmatpush1.msra.mxu0 0.0
  %597 = vmatprep.subr.mxu0 0.0
  %598 = vmatpush1.msra.mxu0 0.0
  %599 = vmatprep.subr.mxu0 0.0
  %600 = vmatpush1.msra.mxu0 0.0
  %601 = vmatprep.subr.mxu0 0.0
  %602 = vmatpush1.msra.mxu0 0.0
  %603 = vmatprep.subr.mxu0 0.0
  %604 = vmatpush1.msra.mxu0 0.0
  %605 = vmatprep.subr.mxu0 0.0
  %606 = vmatpush1.msra.mxu0 0.0
  %607 = vmatprep.subr.mxu0 0.0
  %608 = vmatpush1.msra.mxu0 0.0
  %609 = vmatprep.subr.mxu0 0.0
  %610 = vmatpush1.msra.mxu0 0.0
  %611 = vmatprep.subr.mxu0 0.0
  %612 = vmatpush1.msra.mxu0 0.0
  %613 = vmatprep.subr.mxu0 0.0
  %614 = vmatpush1.msra.mxu0 0.0
  %615 = vmatprep.subr.mxu0 0.0
  %616 = vmatpush1.msra.mxu0 0.0
  %617 = vmatprep.subr.mxu0 0.0
  %618 = vmatpush1.msra.mxu0 0.0
  %619 = vmatprep.subr.mxu0 0.0
  %620 = vmatpush1.msra.mxu0 0.0
  %621 = vmatprep.subr.mxu0 0.0
  %622 = vmatpush1.msra.mxu0 0.0
  %623 = vmatprep.subr.mxu0 0.0
  %624 = vmatpush1.msra.mxu0 0.0
  %625 = vmatprep.subr.mxu0 0.0
  %626 = vmatpush1.msra.mxu0 0.0
  %627 = vmatprep.subr.mxu0 0.0
  %628 = vmatpush1.msra.mxu0 0.0
  %629 = vmatprep.subr.mxu0 0.0
  %630 = vmatpush1.msra.mxu0 0.0
  %631 = vmatprep.subr.mxu0 0.0
  %632 = vmatpush1.msra.mxu0 0.0
  %633 = vmatprep.subr.mxu0 0.0
  %634 = vmatpush1.msra.mxu0 0.0
  %635 = vmatprep.subr.mxu0 0.0
  %636 = vmatpush1.msra.mxu0 0.0
  %637 = vmatprep.subr.mxu0 0.0
  %638 = vmatpush1.msra.mxu0 0.0
  %639 = vmatprep.subr.mxu0 0.0
  %640 = vmatpush1.msra.mxu0 0.0
  %641 = vmatprep.subr.mxu0 0.0
  %642 = vmatpush1.msra.mxu0 0.0
  %643 = vmatprep.subr.mxu0 0.0
  %644 = vmatpush1.msra.mxu0 0.0
  %645 = vmatprep.subr.mxu0 0.0
  %646 = vmatpush1.msra.mxu0 0.0
  %647 = vmatprep.subr.mxu0 0.0
  %648 = vmatpush1.msra.mxu0 0.0
  %649 = vmatprep.subr.mxu0 0.0
  %650 = vmatpush1.msra.mxu0 0.0
  %651 = vmatprep.mubr.f32.mxu0 0.0
  %652 = vmatmul.mubr.f32.gmra.mrb[0].mxu0 %v580
  %v653 = vpop.f32.mrb[0].mxu0
  %v654 = vadd.f32 0.0, %v653
  %v655 = vpop.f32.mrb[0].mxu0
  %656 = vmatprep.mubr.f32.mxu0 0.0
  %657 = vmatmul.mubr.f32.gmra.mrb[0].mxu0 %v583
  %v658 = vpop.f32.mrb[0].mxu0
  %v659 = vadd.f32 0.0, %v658
  %v660 = vpop.f32.mrb[0].mxu0
  %661 = vdwg.mxu0
  %v662 = vadd.f32 %v567, %v654
  %v663 = vadd.f32 %v572, %v659
  %v664 = vld [vmem:[%s284] sm:$0xff]
  %v665 = vld [vmem:[%s284 + $0x8] sm:$0xff]
  %666 = vrot.lane.b32.xlu0 %v402, 127
  %v667 = vpop.permute.xlu0 %666
  %v669 = vsel %vm24, %v664, 0
  %v672 = vsel %vm24, %v665, 0
  %v674 = vsel %vm31, %v667, 0
  %676 = vmatprep.subr.mxu0 0.0
  %677 = vmatpush1.msra.mxu0 %v674
  %678 = vmatprep.subr.mxu0 0.0
  %679 = vmatpush1.msra.mxu0 0.0
  %680 = vmatprep.subr.mxu0 0.0
  %681 = vmatpush1.msra.mxu0 0.0
  %682 = vmatprep.subr.mxu0 0.0
  %683 = vmatpush1.msra.mxu0 0.0
  %684 = vmatprep.subr.mxu0 0.0
  %685 = vmatpush1.msra.mxu0 0.0
  %686 = vmatprep.subr.mxu0 0.0
  %687 = vmatpush1.msra.mxu0 0.0
  %688 = vmatprep.subr.mxu0 0.0
  %689 = vmatpush1.msra.mxu0 0.0
  %690 = vmatprep.subr.mxu0 0.0
  %691 = vmatpush1.msra.mxu0 0.0
  %692 = vmatprep.subr.mxu0 0.0
  %693 = vmatpush1.msra.mxu0 0.0
  %694 = vmatprep.subr.mxu0 0.0
  %695 = vmatpush1.msra.mxu0 0.0
  %696 = vmatprep.subr.mxu0 0.0
  %697 = vmatpush1.msra.mxu0 0.0
  %698 = vmatprep.subr.mxu0 0.0
  %699 = vmatpush1.msra.mxu0 0.0
  %700 = vmatprep.subr.mxu0 0.0
  %701 = vmatpush1.msra.mxu0 0.0
  %702 = vmatprep.subr.mxu0 0.0
  %703 = vmatpush1.msra.mxu0 0.0
  %704 = vmatprep.subr.mxu0 0.0
  %705 = vmatpush1.msra.mxu0 0.0
  %706 = vmatprep.subr.mxu0 0.0
  %707 = vmatpush1.msra.mxu0 0.0
  %708 = vmatprep.subr.mxu0 0.0
  %709 = vmatpush1.msra.mxu0 0.0
  %710 = vmatprep.subr.mxu0 0.0
  %711 = vmatpush1.msra.mxu0 0.0
  %712 = vmatprep.subr.mxu0 0.0
  %713 = vmatpush1.msra.mxu0 0.0
  %714 = vmatprep.subr.mxu0 0.0
  %715 = vmatpush1.msra.mxu0 0.0
  %716 = vmatprep.subr.mxu0 0.0
  %717 = vmatpush1.msra.mxu0 0.0
  %718 = vmatprep.subr.mxu0 0.0
  %719 = vmatpush1.msra.mxu0 0.0
  %720 = vmatprep.subr.mxu0 0.0
  %721 = vmatpush1.msra.mxu0 0.0
  %722 = vmatprep.subr.mxu0 0.0
  %723 = vmatpush1.msra.mxu0 0.0
  %724 = vmatprep.subr.mxu0 0.0
  %725 = vmatpush1.msra.mxu0 0.0
  %726 = vmatprep.subr.mxu0 0.0
  %727 = vmatpush1.msra.mxu0 0.0
  %728 = vmatprep.subr.mxu0 0.0
  %729 = vmatpush1.msra.mxu0 0.0
  %730 = vmatprep.subr.mxu0 0.0
  %731 = vmatpush1.msra.mxu0 0.0
  %732 = vmatprep.subr.mxu0 0.0
  %733 = vmatpush1.msra.mxu0 0.0
  %734 = vmatprep.subr.mxu0 0.0
  %735 = vmatpush1.msra.mxu0 0.0
  %736 = vmatprep.subr.mxu0 0.0
  %737 = vmatpush1.msra.mxu0 0.0
  %738 = vmatprep.subr.mxu0 0.0
  %739 = vmatpush1.msra.mxu0 0.0
  %740 = vmatprep.mubr.f32.mxu0 0.0
  %741 = vmatmul.mubr.f32.gmra.mrb[0].mxu0 %v669
  %v742 = vpop.f32.mrb[0].mxu0
  %v743 = vadd.f32 0.0, %v742
  %v744 = vpop.f32.mrb[0].mxu0
  %745 = vmatprep.mubr.f32.mxu0 0.0
  %746 = vmatmul.mubr.f32.gmra.mrb[0].mxu0 %v672
  %v747 = vpop.f32.mrb[0].mxu0
  %v748 = vadd.f32 0.0, %v747
  %v749 = vpop.f32.mrb[0].mxu0
  %750 = vdwg.mxu0
  %v751 = vadd.f32 %v662, %v743
  %v752 = vadd.f32 %v663, %v748
  %v753 = vpack.c.bf16 %v751, %v751
  %s754 = scalar_lea.vmem %s3, 4
  %755 = vst.msk [vmem:[%s754] sm:$0xf] %vm375, %v753
  %v756 = vpack.c.bf16 %v752, %v752
  %s757 = scalar_lea.vmem %s4, 4
  %758 = vst.msk [vmem:[%s757] sm:$0xf] %vm375, %v756
  %v759 = vsel %vm379, %v751, 0.0
  %760 = vadd.xlane.f32.xlu0 %v759
  %v761 = vpop.xlane.xlu0 %760
  %v762 = vsel %vm379, %v752, 0.0
  %763 = vadd.xlane.f32.xlu0 %v762
  %v764 = vpop.xlane.xlu0 %763
  %v765 = vmul.f32 %v751, %v751
  %v766 = vmul.f32 %v752, %v752
  %v767 = vsel %vm379, %v765, 0.0
  %768 = vadd.xlane.f32.xlu0 %v767
  %v769 = vpop.xlane.xlu0 %768
  %v770 = vsel %vm379, %v766, 0.0
  %771 = vadd.xlane.f32.xlu0 %v770
  %v772 = vpop.xlane.xlu0 %771
  %v773 = vsel %vm394, %v761, %v769
  %v774 = vsel %vm394, %v764, %v772
  %v775 = vadd.f32 %v397, %v773
  %v776 = vadd.f32 %v398, %v774
  %vm777 = vcmask 15360
  %778 = vst.msk [vmem:[%s5] sm:$0xff] %vm777, %v775
  %779 = vst.msk [vmem:[%s5 + $0x8] sm:$0xff] %vm777, %v776
  // Predicated region
  $region14: #{residual_block.3} parent=0 // pred_check
    _
  $region15: #{residual_block.3} parent=0 // pred_check_branch
    %781 = sbr.rel (0) target = $region17
  $region16: #{residual_block.3} parent=0 // pred_region
    _
  $region17: #{residual_block.3} parent=0 // pred_fallthru
    _
  // Predicated region
  $region18: #{residual_block.3} parent=0 // pred_check
    _
  $region19: #{residual_block.3} parent=0 // pred_check_branch
    %783 = sbr.rel (0) target = $region21
  $region20: #{residual_block.3} parent=0 // pred_region
    _
  $region21: #{residual_block.3} parent=0 // pred_fallthru
    _
  // Predicated region
  $region22: #{residual_block.3} parent=0 // pred_check
    _
  $region23: #{residual_block.3} parent=0 // pred_check_branch
    %785 = sbr.rel (0) target = $region25
  $region24: #{residual_block.3} parent=0 // pred_region
    _
  $region25: #{residual_block.3} parent=0 // pred_fallthru
    _
  // Predicated region
  $region26: #{residual_block.3} parent=0 // pred_check
    _
  $region27: #{residual_block.3} parent=0 // pred_check_branch
    %787 = sbr.rel (0) target = $region29
  $region28: #{residual_block.3} parent=0 // pred_region
    _
  $region29: #{residual_block.3} parent=0 // pred_fallthru
    _
  // Predicated region
  $region30: #{residual_block.3} parent=0 // pred_check
    _
  $region31: #{residual_block.3} parent=0 // pred_check_branch
    %789 = sbr.rel (0) target = $region33
  $region32: #{residual_block.3} parent=0 // pred_region
    _
  $region33: #{residual_block.3} parent=0 // pred_fallthru
    _
  // Predicated region
  $region34: #{residual_block.3} parent=0 // pred_check
    _
  $region35: #{residual_block.3} parent=0 // pred_check_branch
    %791 = sbr.rel (0) target = $region37
  $region36: #{residual_block.3} parent=0 // pred_region
    _
  $region37: #{residual_block.3} parent=0 // pred_fallthru
    _

// kernel: residual_block.4
$region0: #{residual_block.4}
  #allocation0 [shape = 'u32[]', space=smem, size = 0x4, offset = 0x4, fixed_abs, tag = 'smem constant byte address 0x4 - core index']
  #allocation1 [shape = 'u32[144,128]{1,0:T(1,128)}', space=vmem, size = 0x12000, scoped, tag = 'internal scratch']
  %s0 = inlined_call_operand.vmem [shape: bf16[2,8,8], index: 0, kind: input, shape index: {}]
  %s1 = inlined_call_operand.vmem [shape: f32[8,2], index: 1, kind: input, shape index: {}]
  %s2 = inlined_call_operand.vmem [shape: f32[4,8,8], index: 2, kind: input, shape index: {}]
  %s3 = inlined_call_operand.vmem [shape: bf16[2,8,8], index: 3, kind: output, shape index: {0}]
  %s4 = inlined_call_operand.vmem [shape: f32[1,8,2], index: 4, kind: output, shape index: {1}]
  %5 = xla_tuple %s3, %s4
  %s6 = sld [smem:[#allocation0]]
  $region30: #{residual_block.4} parent=0
    _
  %s8 = ssub.s32 1, %s6
  %s9 = scalar_select 0, %s8, %s6
  // Predicated region
  $region2: #{residual_block.4} parent=0 // pred_check
    _
  $region3: #{residual_block.4} parent=0 // pred_check_branch
    %11 = sbr.rel (0) target = $region5
  $region4: #{residual_block.4} parent=0 // pred_region
    _
  $region5: #{residual_block.4} parent=0 // pred_fallthru
    _
  // Predicated region
  $region6: #{residual_block.4} parent=0 // pred_check
    _
  $region7: #{residual_block.4} parent=0 // pred_check_branch
    %13 = sbr.rel (0) target = $region9
  $region8: #{residual_block.4} parent=0 // pred_region
    _
  $region9: #{residual_block.4} parent=0 // pred_fallthru
    _
  // Predicated region
  $region10: #{residual_block.4} parent=0 // pred_check
    _
  $region11: #{residual_block.4} parent=0 // pred_check_branch
    %15 = sbr.rel (0) target = $region13
  $region12: #{residual_block.4} parent=0 // pred_region
    _
  $region13: #{residual_block.4} parent=0 // pred_fallthru
    _
  %v16 = vld [vmem:[%s1] sm:$0xff]
  %v17 = vld [vmem:[%s0] sm:$0xf]
  %v18 = vunpack.c.l.bf16 %v17
  %20 = vset.pattern.permute.xlu0 0
  %21 = vperm.xlu0 %20, %v16
  %v22 = vpop.permute.xlu0 %21
  %v24 = vmul.f32 %v18, %v22
  %25 = vset.pattern.permute.xlu0 1
  %26 = vperm.xlu0 %25, %v16
  %v27 = vpop.permute.xlu0 %26
  %v29 = vadd.f32 %v24, %v27
  %vm30 = vcmp.gt.f32.partialorder %v29, 0.0
  %v31 = vmul.f32 %v29, 0.2
  %v32 = vsel %vm30, %v29, %v31
  %34 = vrot.lane.b32.xlu0 %v32, 1
  %v35 = vpop.permute.xlu0 %34
  %vm37 = vcmask 7168
  %v38 = vsel %vm37, 0.0, %v35
  %vm39 = vcmask 72704
  %v40 = vsel %vm39, %v38, 0.0
  %v41 = vld [vmem:[%s2] sm:$0xff]
  %s42 = scalar_lea.vmem %s2, 8
  %v43 = vld [vmem:[%s42] sm:$0xff]
  %45 = vrot.lane.b32.xlu0 %v40, 127
  %v46 = vpop.permute.xlu0 %45
  %vm48 = vcmask 64512
  %v50 = vsel %vm48, %v43, 0
  %52 = vmatprep.subr.mxu0 0.0
  %53 = vmatpush1.msra.mxu0 %v46
  %54 = vmatprep.subr.mxu0 0.0
  %55 = vmatpush1.msra.mxu0 0.0
  %56 = vmatprep.subr.mxu0 0.0
  %57 = vmatpush1.msra.mxu0 0.0
  %58 = vmatprep.subr.mxu0 0.0
  %59 = vmatpush1.msra.mxu0 0.0
  %60 = vmatprep.subr.mxu0 0.0
  %61 = vmatpush1.msra.mxu0 0.0
  %62 = vmatprep.subr.mxu0 0.0
  %63 = vmatpush1.msra.mxu0 0.0
  %64 = vmatprep.subr.mxu0 0.0
  %65 = vmatpush1.msra.mxu0 0.0
  %66 = vmatprep.subr.mxu0 0.0
  %67 = vmatpush1.msra.mxu0 0.0
  %68 = vmatprep.subr.mxu0 0.0
  %69 = vmatpush1.msra.mxu0 0.0
  %70 = vmatprep.subr.mxu0 0.0
  %71 = vmatpush1.msra.mxu0 0.0
  %72 = vmatprep.subr.mxu0 0.0
  %73 = vmatpush1.msra.mxu0 0.0
  %74 = vmatprep.subr.mxu0 0.0
  %75 = vmatpush1.msra.mxu0 0.0
  %76 = vmatprep.subr.mxu0 0.0
  %77 = vmatpush1.msra.mxu0 0.0
  %78 = vmatprep.subr.mxu0 0.0
  %79 = vmatpush1.msra.mxu0 0.0
  %80 = vmatprep.subr.mxu0 0.0
  %81 = vmatpush1.msra.mxu0 0.0
  %82 = vmatprep.subr.mxu0 0.0
  %83 = vmatpush1.msra.mxu0 0.0
  %84 = vmatprep.subr.mxu0 0.0
  %85 = vmatpush1.msra.mxu0 0.0
  %86 = vmatprep.subr.mxu0 0.0
  %87 = vmatpush1.msra.mxu0 0.0
  %88 = vmatprep.subr.mxu0 0.0
  %89 = vmatpush1.msra.mxu0 0.0
  %90 = vmatprep.subr.mxu0 0.0
  %91 = vmatpush1.msra.mxu0 0.0
  %92 = vmatprep.subr.mxu0 0.0
  %93 = vmatpush1.msra.mxu0 0.0
  %94 = vmatprep.subr.mxu0 0.0
  %95 = vmatpush1.msra.mxu0 0.0
  %96 = vmatprep.subr.mxu0 0.0
  %97 = vmatpush1.msra.mxu0 0.0
  %98 = vmatprep.subr.mxu0 0.0
  %99 = vmatpush1.msra.mxu0 0.0
  %100 = vmatprep.subr.mxu0 0.0
  %101 = vmatpush1.msra.mxu0 0.0
  %102 = vmatprep.subr.mxu0 0.0
  %103 = vmatpush1.msra.mxu0 0.0
  %104 = vmatprep.subr.mxu0 0.0
  %105 = vmatpush1.msra.mxu0 0.0
  %106 = vmatprep.subr.mxu0 0.0
  %107 = vmatpush1.msra.mxu0 0.0
  %108 = vmatprep.subr.mxu0 0.0
  %109 = vmatpush1.msra.mxu0 0.0
  %110 = vmatprep.subr.mxu0 0.0
  %111 = vmatpush1.msra.mxu0 0.0
  %112 = vmatprep.subr.mxu0 0.0
  %113 = vmatpush1.msra.mxu0 0.0
  %114 = vmatprep.subr.mxu0 0.0
  %115 = vmatpush1.msra.mxu0 0.0
  %116 = vmatprep.mubr.f32.mxu0 0.0
  %117 = vmatmul.mubr.f32.gmra.mrb[0].mxu0 %v50
  %v118 = vpop.f32.mrb[0].mxu0
  %v119 = vadd.f32 0.0, %v118
  %v120 = vpop.f32.mrb[0].mxu0
  %121 = vdwg.mxu0
  %v123 = vsel %vm48, %v41, 0
  %125 = vmatprep.subr.mxu0 0.0
  %126 = vmatpush1.msra.mxu0 %v40
  %127 = vmatprep.subr.mxu0 0.0
  %128 = vmatpush1.msra.mxu0 0.0
  %129 = vmatprep.subr.mxu0 0.0
  %130 = vmatpush1.msra.mxu0 0.0
  %131 = vmatprep.subr.mxu0 0.0
  %132 = vmatpush1.msra.mxu0 0.0
  %133 = vmatprep.subr.mxu0 0.0
  %134 = vmatpush1.msra.mxu0 0.0
  %135 = vmatprep.subr.mxu0 0.0
  %136 = vmatpush1.msra.mxu0 0.0
  %137 = vmatprep.subr.mxu0 0.0
  %138 = vmatpush1.msra.mxu0 0.0
  %139 = vmatprep.subr.mxu0 0.0
  %140 = vmatpush1.msra.mxu0 0.0
  %141 = vmatprep.subr.mxu0 0.0
  %142 = vmatpush1.msra.mxu0 0.0
  %143 = vmatprep.subr.mxu0 0.0
  %144 = vmatpush1.msra.mxu0 0.0
  %145 = vmatprep.subr.mxu0 0.0
  %146 = vmatpush1.msra.mxu0 0.0
  %147 = vmatprep.subr.mxu0 0.0
  %148 = vmatpush1.msra.mxu0 0.0
  %149 = vmatprep.subr.mxu0 0.0
  %150 = vmatpush1.msra.mxu0 0.0
  %151 = vmatprep.subr.mxu0 0.0
  %152 = vmatpush1.msra.mxu0 0.0
  %153 = vmatprep.subr.mxu0 0.0
  %154 = vmatpush1.msra.mxu0 0.0
  %155 = vmatprep.subr.mxu0 0.0
  %156 = vmatpush1.msra.mxu0 0.0
  %157 = vmatprep.subr.mxu0 0.0
  %158 = vmatpush1.msra.mxu0 0.0
  %159 = vmatprep.subr.mxu0 0.0
  %160 = vmatpush1.msra.mxu0 0.0
  %161 = vmatprep.subr.mxu0 0.0
  %162 = vmatpush1.msra.mxu0 0.0
  %163 = vmatprep.subr.mxu0 0.0
  %164 = vmatpush1.msra.mxu0 0.0
  %165 = vmatprep.subr.mxu0 0.0
  %166 = vmatpush1.msra.mxu0 0.0
  %167 = vmatprep.subr.mxu0 0.0
  %168 = vmatpush1.msra.mxu0 0.0
  %169 = vmatprep.subr.mxu0 0.0
  %170 = vmatpush1.msra.mxu0 0.0
  %171 = vmatprep.subr.mxu0 0.0
  %172 = vmatpush1.msra.mxu0 0.0
  %173 = vmatprep.subr.mxu0 0.0
  %174 = vmatpush1.msra.mxu0 0.0
  %175 = vmatprep.subr.mxu0 0.0
  %176 = vmatpush1.msra.mxu0 0.0
  %177 = vmatprep.subr.mxu0 0.0
  %178 = vmatpush1.msra.mxu0 0.0
  %179 = vmatprep.subr.mxu0 0.0
  %180 = vmatpush1.msra.mxu0 0.0
  %181 = vmatprep.subr.mxu0 0.0
  %182 = vmatpush1.msra.mxu0 0.0
  %183 = vmatprep.subr.mxu0 0.0
  %184 = vmatpush1.msra.mxu0 0.0
  %185 = vmatprep.subr.mxu0 0.0
  %186 = vmatpush1.msra.mxu0 0.0
  %187 = vmatprep.subr.mxu0 0.0
  %188 = vmatpush1.msra.mxu0 0.0
  %189 = vmatprep.mubr.f32.mxu0 0.0
  %190 = vmatmul.mubr.f32.gmra.mrb[0].mxu0 %v123
  %v191 = vpop.f32.mrb[0].mxu0
  %v192 = vadd.f32 %v119, %v191
  %v193 = vpop.f32.mrb[0].mxu0
  %194 = vdwg.mxu0
  %s195 = scalar_lea.vmem %s2, 16
  %v196 = vld [vmem:[%s195] sm:$0xff]
  %197 = vrot.lane.b32.xlu0 %v40, 126
  %v198 = vpop.permute.xlu0 %197
  %v201 = vsel %vm48, %v196, 0
  %203 = vmatprep.subr.mxu0 0.0
  %204 = vmatpush1.msra.mxu0 %v198
  %205 = vmatprep.subr.mxu0 0.0
  %206 = vmatpush1.msra.mxu0 0.0
  %207 = vmatprep.subr.mxu0 0.0
  %208 = vmatpush1.msra.mxu0 0.0
  %209 = vmatprep.subr.mxu0 0.0
  %210 = vmatpush1.msra.mxu0 0.0
  %211 = vmatprep.subr.mxu0 0.0
  %212 = vmatpush1.msra.mxu0 0.0
  %213 = vmatprep.subr.mxu0 0.0
  %214 = vmatpush1.msra.mxu0 0.0
  %215 = vmatprep.subr.mxu0 0.0
  %216 = vmatpush1.msra.mxu0 0.0
  %217 = vmatprep.subr.mxu0 0.0
  %218 = vmatpush1.msra.mxu0 0.0
  %219 = vmatprep.subr.mxu0 0.0
  %220 = vmatpush1.msra.mxu0 0.0
  %221 = vmatprep.subr.mxu0 0.0
  %222 = vmatpush1.msra.mxu0 0.0
  %223 = vmatprep.subr.mxu0 0.0
  %224 = vmatpush1.msra.mxu0 0.0
  %225 = vmatprep.subr.mxu0 0.0
  %226 = vmatpush1.msra.mxu0 0.0
  %227 = vmatprep.subr.mxu0 0.0
  %228 = vmatpush1.msra.mxu0 0.0
  %229 = vmatprep.subr.mxu0 0.0
  %230 = vmatpush1.msra.mxu0 0.0
  %231 = vmatprep.subr.mxu0 0.0
  %232 = vmatpush1.msra.mxu0 0.0
  %233 = vmatprep.subr.mxu0 0.0
  %234 = vmatpush1.msra.mxu0 0.0
  %235 = vmatprep.subr.mxu0 0.0
  %236 = vmatpush1.msra.mxu0 0.0
  %237 = vmatprep.subr.mxu0 0.0
  %238 = vmatpush1.msra.mxu0 0.0
  %239 = vmatprep.subr.mxu0 0.0
  %240 = vmatpush1.msra.mxu0 0.0
  %241 = vmatprep.subr.mxu0 0.0
  %242 = vmatpush1.msra.mxu0 0.0
  %243 = vmatprep.subr.mxu0 0.0
  %244 = vmatpush1.msra.mxu0 0.0
  %245 = vmatprep.subr.mxu0 0.0
  %246 = vmatpush1.msra.mxu0 0.0
  %247 = vmatprep.subr.mxu0 0.0
  %248 = vmatpush1.msra.mxu0 0.0
  %249 = vmatprep.subr.mxu0 0.0
  %250 = vmatpush1.msra.mxu0 0.0
  %251 = vmatprep.subr.mxu0 0.0
  %252 = vmatpush1.msra.mxu0 0.0
  %253 = vmatprep.subr.mxu0 0.0
  %254 = vmatpush1.msra.mxu0 0.0
  %255 = vmatprep.subr.mxu0 0.0
  %256 = vmatpush1.msra.mxu0 0.0
  %257 = vmatprep.subr.mxu0 0.0
  %258 = vmatpush1.msra.mxu0 0.0
  %259 = vmatprep.subr.mxu0 0.0
  %260 = vmatpush1.msra.mxu0 0.0
  %261 = vmatprep.subr.mxu0 0.0
  %262 = vmatpush1.msra.mxu0 0.0
  %263 = vmatprep.subr.mxu0 0.0
  %264 = vmatpush1.msra.mxu0 0.0
  %265 = vmatprep.subr.mxu0 0.0
  %266 = vmatpush1.msra.mxu0 0.0
  %267 = vmatprep.mubr.f32.mxu0 0.0
  %268 = vmatmul.mubr.f32.gmra.mrb[0].mxu0 %v201
  %v269 = vpop.f32.mrb[0].mxu0
  %v270 = vadd.f32 0.0, %v269
  %v271 = vpop.f32.mrb[0].mxu0
  %272 = vdwg.mxu0
  %v273 = vadd.f32 %v192, %v270
  %s274 = scalar_lea.vmem %s2, 24
  %v275 = vld [vmem:[%s274] sm:$0xff]
  %276 = vrot.lane.b32.xlu0 %v40, 125
  %v277 = vpop.permute.xlu0 %276
  %v280 = vsel %vm48, %v275, 0
  %282 = vmatprep.subr.mxu0 0.0
  %283 = vmatpush1.msra.mxu0 %v277
  %284 = vmatprep.subr.mxu0 0.0
  %285 = vmatpush1.msra.mxu0 0.0
  %286 = vmatprep.subr.mxu0 0.0
  %287 = vmatpush1.msra.mxu0 0.0
  %288 = vmatprep.subr.mxu0 0.0
  %289 = vmatpush1.msra.mxu0 0.0
  %290 = vmatprep.subr.mxu0 0.0
  %291 = vmatpush1.msra.mxu0 0.0
  %292 = vmatprep.subr.mxu0 0.0
  %293 = vmatpush1.msra.mxu0 0.0
  %294 = vmatprep.subr.mxu0 0.0
  %295 = vmatpush1.msra.mxu0 0.0
  %296 = vmatprep.subr.mxu0 0.0
  %297 = vmatpush1.msra.mxu0 0.0
  %298 = vmatprep.subr.mxu0 0.0
  %299 = vmatpush1.msra.mxu0 0.0
  %300 = vmatprep.subr.mxu0 0.0
  %301 = vmatpush1.msra.mxu0 0.0
  %302 = vmatprep.subr.mxu0 0.0
  %303 = vmatpush1.msra.mxu0 0.0
  %304 = vmatprep.subr.mxu0 0.0
  %305 = vmatpush1.msra.mxu0 0.0
  %306 = vmatprep.subr.mxu0 0.0
  %307 = vmatpush1.msra.mxu0 0.0
  %308 = vmatprep.subr.mxu0 0.0
  %309 = vmatpush1.msra.mxu0 0.0
  %310 = vmatprep.subr.mxu0 0.0
  %311 = vmatpush1.msra.mxu0 0.0
  %312 = vmatprep.subr.mxu0 0.0
  %313 = vmatpush1.msra.mxu0 0.0
  %314 = vmatprep.subr.mxu0 0.0
  %315 = vmatpush1.msra.mxu0 0.0
  %316 = vmatprep.subr.mxu0 0.0
  %317 = vmatpush1.msra.mxu0 0.0
  %318 = vmatprep.subr.mxu0 0.0
  %319 = vmatpush1.msra.mxu0 0.0
  %320 = vmatprep.subr.mxu0 0.0
  %321 = vmatpush1.msra.mxu0 0.0
  %322 = vmatprep.subr.mxu0 0.0
  %323 = vmatpush1.msra.mxu0 0.0
  %324 = vmatprep.subr.mxu0 0.0
  %325 = vmatpush1.msra.mxu0 0.0
  %326 = vmatprep.subr.mxu0 0.0
  %327 = vmatpush1.msra.mxu0 0.0
  %328 = vmatprep.subr.mxu0 0.0
  %329 = vmatpush1.msra.mxu0 0.0
  %330 = vmatprep.subr.mxu0 0.0
  %331 = vmatpush1.msra.mxu0 0.0
  %332 = vmatprep.subr.mxu0 0.0
  %333 = vmatpush1.msra.mxu0 0.0
  %334 = vmatprep.subr.mxu0 0.0
  %335 = vmatpush1.msra.mxu0 0.0
  %336 = vmatprep.subr.mxu0 0.0
  %337 = vmatpush1.msra.mxu0 0.0
  %338 = vmatprep.subr.mxu0 0.0
  %339 = vmatpush1.msra.mxu0 0.0
  %340 = vmatprep.subr.mxu0 0.0
  %341 = vmatpush1.msra.mxu0 0.0
  %342 = vmatprep.subr.mxu0 0.0
  %343 = vmatpush1.msra.mxu0 0.0
  %344 = vmatprep.subr.mxu0 0.0
  %345 = vmatpush1.msra.mxu0 0.0
  %346 = vmatprep.mubr.f32.mxu0 0.0
  %347 = vmatmul.mubr.f32.gmra.mrb[0].mxu0 %v280
  %v348 = vpop.f32.mrb[0].mxu0
  %v349 = vadd.f32 0.0, %v348
  %v350 = vpop.f32.mrb[0].mxu0
  %351 = vdwg.mxu0
  %v352 = vadd.f32 %v273, %v349
  %v353 = vpack.c.bf16 %v352, %v352
  %vm354 = vcmask 60416
  %355 = vst.msk [vmem:[%s3] sm:$0xf] %vm354, %v353
  %v356 = vsel %vm48, %v352, 0.0
  %357 = vadd.xlane.f32.xlu0 %v356
  %v358 = vpop.xlane.xlu0 %357
  %v359 = vmul.f32 %v352, %v352
  %v360 = vsel %vm48, %v359, 0.0
  %361 = vadd.xlane.f32.xlu0 %v360
  %v362 = vpop.xlane.xlu0 %361
  %v363 = vsel %vm37, %v358, %v362
  %v364 = vadd.f32 %v363, 0.0
  %s365 = scalar_lea.vmem %s0, 4
  %v366 = vld [vmem:[%s365] sm:$0xf]
  %v367 = vunpack.c.l.bf16 %v366
  %v368 = vmul.f32 %v367, %v22
  %v369 = vadd.f32 %v368, %v27
  %vm370 = vcmp.gt.f32.partialorder %v369, 0.0
  %v371 = vmul.f32 %v369, 0.2
  %v372 = vsel %vm370, %v369, %v371
  %374 = vrot.lane.b32.xlu0 %v372, 1
  %v375 = vpop.permute.xlu0 %374
  %v377 = vsel %vm37, 0.0, %v375
  %v378 = vsel %vm39, %v377, 0.0
  %v379 = vld [vmem:[%s2] sm:$0xff]
  %v380 = vld [vmem:[%s42] sm:$0xff]
  %382 = vrot.lane.b32.xlu0 %v378, 127
  %v383 = vpop.permute.xlu0 %382
  %v386 = vsel %vm48, %v380, 0
  %388 = vmatprep.subr.mxu0 0.0
  %389 = vmatpush1.msra.mxu0 %v383
  %390 = vmatprep.subr.mxu0 0.0
  %391 = vmatpush1.msra.mxu0 0.0
  %392 = vmatprep.subr.mxu0 0.0
  %393 = vmatpush1.msra.mxu0 0.0
  %394 = vmatprep.subr.mxu0 0.0
  %395 = vmatpush1.msra.mxu0 0.0
  %396 = vmatprep.subr.mxu0 0.0
  %397 = vmatpush1.msra.mxu0 0.0
  %398 = vmatprep.subr.mxu0 0.0
  %399 = vmatpush1.msra.mxu0 0.0
  %400 = vmatprep.subr.mxu0 0.0
  %401 = vmatpush1.msra.mxu0 0.0
  %402 = vmatprep.subr.mxu0 0.0
  %403 = vmatpush1.msra.mxu0 0.0
  %404 = vmatprep.subr.mxu0 0.0
  %405 = vmatpush1.msra.mxu0 0.0
  %406 = vmatprep.subr.mxu0 0.0
  %407 = vmatpush1.msra.mxu0 0.0
  %408 = vmatprep.subr.mxu0 0.0
  %409 = vmatpush1.msra.mxu0 0.0
  %410 = vmatprep.subr.mxu0 0.0
  %411 = vmatpush1.msra.mxu0 0.0
  %412 = vmatprep.subr.mxu0 0.0
  %413 = vmatpush1.msra.mxu0 0.0
  %414 = vmatprep.subr.mxu0 0.0
  %415 = vmatpush1.msra.mxu0 0.0
  %416 = vmatprep.subr.mxu0 0.0
  %417 = vmatpush1.msra.mxu0 0.0
  %418 = vmatprep.subr.mxu0 0.0
  %419 = vmatpush1.msra.mxu0 0.0
  %420 = vmatprep.subr.mxu0 0.0
  %421 = vmatpush1.msra.mxu0 0.0
  %422 = vmatprep.subr.mxu0 0.0
  %423 = vmatpush1.msra.mxu0 0.0
  %424 = vmatprep.subr.mxu0 0.0
  %425 = vmatpush1.msra.mxu0 0.0
  %426 = vmatprep.subr.mxu0 0.0
  %427 = vmatpush1.msra.mxu0 0.0
  %428 = vmatprep.subr.mxu0 0.0
  %429 = vmatpush1.msra.mxu0 0.0
  %430 = vmatprep.subr.mxu0 0.0
  %431 = vmatpush1.msra.mxu0 0.0
  %432 = vmatprep.subr.mxu0 0.0
  %433 = vmatpush1.msra.mxu0 0.0
  %434 = vmatprep.subr.mxu0 0.0
  %435 = vmatpush1.msra.mxu0 0.0
  %436 = vmatprep.subr.mxu0 0.0
  %437 = vmatpush1.msra.mxu0 0.0
  %438 = vmatprep.subr.mxu0 0.0
  %439 = vmatpush1.msra.mxu0 0.0
  %440 = vmatprep.subr.mxu0 0.0
  %441 = vmatpush1.msra.mxu0 0.0
  %442 = vmatprep.subr.mxu0 0.0
  %443 = vmatpush1.msra.mxu0 0.0
  %444 = vmatprep.subr.mxu0 0.0
  %445 = vmatpush1.msra.mxu0 0.0
  %446 = vmatprep.subr.mxu0 0.0
  %447 = vmatpush1.msra.mxu0 0.0
  %448 = vmatprep.subr.mxu0 0.0
  %449 = vmatpush1.msra.mxu0 0.0
  %450 = vmatprep.subr.mxu0 0.0
  %451 = vmatpush1.msra.mxu0 0.0
  %452 = vmatprep.mubr.f32.mxu0 0.0
  %453 = vmatmul.mubr.f32.gmra.mrb[0].mxu0 %v386
  %v454 = vpop.f32.mrb[0].mxu0
  %v455 = vadd.f32 0.0, %v454
  %v456 = vpop.f32.mrb[0].mxu0
  %457 = vdwg.mxu0
  %v459 = vsel %vm48, %v379, 0
  %461 = vmatprep.subr.mxu0 0.0
  %462 = vmatpush1.msra.mxu0 %v378
  %463 = vmatprep.subr.mxu0 0.0
  %464 = vmatpush1.msra.mxu0 0.0
  %465 = vmatprep.subr.mxu0 0.0
  %466 = vmatpush1.msra.mxu0 0.0
  %467 = vmatprep.subr.mxu0 0.0
  %468 = vmatpush1.msra.mxu0 0.0
  %469 = vmatprep.subr.mxu0 0.0
  %470 = vmatpush1.msra.mxu0 0.0
  %471 = vmatprep.subr.mxu0 0.0
  %472 = vmatpush1.msra.mxu0 0.0
  %473 = vmatprep.subr.mxu0 0.0
  %474 = vmatpush1.msra.mxu0 0.0
  %475 = vmatprep.subr.mxu0 0.0
  %476 = vmatpush1.msra.mxu0 0.0
  %477 = vmatprep.subr.mxu0 0.0
  %478 = vmatpush1.msra.mxu0 0.0
  %479 = vmatprep.subr.mxu0 0.0
  %480 = vmatpush1.msra.mxu0 0.0
  %481 = vmatprep.subr.mxu0 0.0
  %482 = vmatpush1.msra.mxu0 0.0
  %483 = vmatprep.subr.mxu0 0.0
  %484 = vmatpush1.msra.mxu0 0.0
  %485 = vmatprep.subr.mxu0 0.0
  %486 = vmatpush1.msra.mxu0 0.0
  %487 = vmatprep.subr.mxu0 0.0
  %488 = vmatpush1.msra.mxu0 0.0
  %489 = vmatprep.subr.mxu0 0.0
  %490 = vmatpush1.msra.mxu0 0.0
  %491 = vmatprep.subr.mxu0 0.0
  %492 = vmatpush1.msra.mxu0 0.0
  %493 = vmatprep.subr.mxu0 0.0
  %494 = vmatpush1.msra.mxu0 0.0
  %495 = vmatprep.subr.mxu0 0.0
  %496 = vmatpush1.msra.mxu0 0.0
  %497 = vmatprep.subr.mxu0 0.0
  %498 = vmatpush1.msra.mxu0 0.0
  %499 = vmatprep.subr.mxu0 0.0
  %500 = vmatpush1.msra.mxu0 0.0
  %501 = vmatprep.subr.mxu0 0.0
  %502 = vmatpush1.msra.mxu0 0.0
  %503 = vmatprep.subr.mxu0 0.0
  %504 = vmatpush1.msra.mxu0 0.0
  %505 = vmatprep.subr.mxu0 0.0
  %506 = vmatpush1.msra.mxu0 0.0
  %507 = vmatprep.subr.mxu0 0.0
  %508 = vmatpush1.msra.mxu0 0.0
  %509 = vmatprep.subr.mxu0 0.0
  %510 = vmatpush1.msra.mxu0 0.0
  %511 = vmatprep.subr.mxu0 0.0
  %512 = vmatpush1.msra.mxu0 0.0
  %513 = vmatprep.subr.mxu0 0.0
  %514 = vmatpush1.msra.mxu0 0.0
  %515 = vmatprep.subr.mxu0 0.0
  %516 = vmatpush1.msra.mxu0 0.0
  %517 = vmatprep.subr.mxu0 0.0
  %518 = vmatpush1.msra.mxu0 0.0
  %519 = vmatprep.subr.mxu0 0.0
  %520 = vmatpush1.msra.mxu0 0.0
  %521 = vmatprep.subr.mxu0 0.0
  %522 = vmatpush1.msra.mxu0 0.0
  %523 = vmatprep.subr.mxu0 0.0
  %524 = vmatpush1.msra.mxu0 0.0
  %525 = vmatprep.mubr.f32.mxu0 0.0
  %526 = vmatmul.mubr.f32.gmra.mrb[0].mxu0 %v459
  %v527 = vpop.f32.mrb[0].mxu0
  %v528 = vadd.f32 %v455, %v527
  %v529 = vpop.f32.mrb[0].mxu0
  %530 = vdwg.mxu0
  %v531 = vld [vmem:[%s195] sm:$0xff]
  %532 = vrot.lane.b32.xlu0 %v378, 126
  %v533 = vpop.permute.xlu0 %532
  %v536 = vsel %vm48, %v531, 0
  %538 = vmatprep.subr.mxu0 0.0
  %539 = vmatpush1.msra.mxu0 %v533
  %540 = vmatprep.subr.mxu0 0.0
  %541 = vmatpush1.msra.mxu0 0.0
  %542 = vmatprep.subr.mxu0 0.0
  %543 = vmatpush1.msra.mxu0 0.0
  %544 = vmatprep.subr.mxu0 0.0
  %545 = vmatpush1.msra.mxu0 0.0
  %546 = vmatprep.subr.mxu0 0.0
  %547 = vmatpush1.msra.mxu0 0.0
  %548 = vmatprep.subr.mxu0 0.0
  %549 = vmatpush1.msra.mxu0 0.0
  %550 = vmatprep.subr.mxu0 0.0
  %551 = vmatpush1.msra.mxu0 0.0
  %552 = vmatprep.subr.mxu0 0.0
  %553 = vmatpush1.msra.mxu0 0.0
  %554 = vmatprep.subr.mxu0 0.0
  %555 = vmatpush1.msra.mxu0 0.0
  %556 = vmatprep.subr.mxu0 0.0
  %557 = vmatpush1.msra.mxu0 0.0
  %558 = vmatprep.subr.mxu0 0.0
  %559 = vmatpush1.msra.mxu0 0.0
  %560 = vmatprep.subr.mxu0 0.0
  %561 = vmatpush1.msra.mxu0 0.0
  %562 = vmatprep.subr.mxu0 0.0
  %563 = vmatpush1.msra.mxu0 0.0
  %564 = vmatprep.subr.mxu0 0.0
  %565 = vmatpush1.msra.mxu0 0.0
  %566 = vmatprep.subr.mxu0 0.0
  %567 = vmatpush1.msra.mxu0 0.0
  %568 = vmatprep.subr.mxu0 0.0
  %569 = vmatpush1.msra.mxu0 0.0
  %570 = vmatprep.subr.mxu0 0.0
  %571 = vmatpush1.msra.mxu0 0.0
  %572 = vmatprep.subr.mxu0 0.0
  %573 = vmatpush1.msra.mxu0 0.0
  %574 = vmatprep.subr.mxu0 0.0
  %575 = vmatpush1.msra.mxu0 0.0
  %576 = vmatprep.subr.mxu0 0.0
  %577 = vmatpush1.msra.mxu0 0.0
  %578 = vmatprep.subr.mxu0 0.0
  %579 = vmatpush1.msra.mxu0 0.0
  %580 = vmatprep.subr.mxu0 0.0
  %581 = vmatpush1.msra.mxu0 0.0
  %582 = vmatprep.subr.mxu0 0.0
  %583 = vmatpush1.msra.mxu0 0.0
  %584 = vmatprep.subr.mxu0 0.0
  %585 = vmatpush1.msra.mxu0 0.0
  %586 = vmatprep.subr.mxu0 0.0
  %587 = vmatpush1.msra.mxu0 0.0
  %588 = vmatprep.subr.mxu0 0.0
  %589 = vmatpush1.msra.mxu0 0.0
  %590 = vmatprep.subr.mxu0 0.0
  %591 = vmatpush1.msra.mxu0 0.0
  %592 = vmatprep.subr.mxu0 0.0
  %593 = vmatpush1.msra.mxu0 0.0
  %594 = vmatprep.subr.mxu0 0.0
  %595 = vmatpush1.msra.mxu0 0.0
  %596 = vmatprep.subr.mxu0 0.0
  %597 = vmatpush1.msra.mxu0 0.0
  %598 = vmatprep.subr.mxu0 0.0
  %599 = vmatpush1.msra.mxu0 0.0
  %600 = vmatprep.subr.mxu0 0.0
  %601 = vmatpush1.msra.mxu0 0.0
  %602 = vmatprep.mubr.f32.mxu0 0.0
  %603 = vmatmul.mubr.f32.gmra.mrb[0].mxu0 %v536
  %v604 = vpop.f32.mrb[0].mxu0
  %v605 = vadd.f32 0.0, %v604
  %v606 = vpop.f32.mrb[0].mxu0
  %607 = vdwg.mxu0
  %v608 = vadd.f32 %v528, %v605
  %v609 = vld [vmem:[%s274] sm:$0xff]
  %610 = vrot.lane.b32.xlu0 %v378, 125
  %v611 = vpop.permute.xlu0 %610
  %v614 = vsel %vm48, %v609, 0
  %616 = vmatprep.subr.mxu0 0.0
  %617 = vmatpush1.msra.mxu0 %v611
  %618 = vmatprep.subr.mxu0 0.0
  %619 = vmatpush1.msra.mxu0 0.0
  %620 = vmatprep.subr.mxu0 0.0
  %621 = vmatpush1.msra.mxu0 0.0
  %622 = vmatprep.subr.mxu0 0.0
  %623 = vmatpush1.msra.mxu0 0.0
  %624 = vmatprep.subr.mxu0 0.0
  %625 = vmatpush1.msra.mxu0 0.0
  %626 = vmatprep.subr.mxu0 0.0
  %627 = vmatpush1.msra.mxu0 0.0
  %628 = vmatprep.subr.mxu0 0.0
  %629 = vmatpush1.msra.mxu0 0.0
  %630 = vmatprep.subr.mxu0 0.0
  %631 = vmatpush1.msra.mxu0 0.0
  %632 = vmatprep.subr.mxu0 0.0
  %633 = vmatpush1.msra.mxu0 0.0
  %634 = vmatprep.subr.mxu0 0.0
  %635 = vmatpush1.msra.mxu0 0.0
  %636 = vmatprep.subr.mxu0 0.0
  %637 = vmatpush1.msra.mxu0 0.0
  %638 = vmatprep.subr.mxu0 0.0
  %639 = vmatpush1.msra.mxu0 0.0
  %640 = vmatprep.subr.mxu0 0.0
  %641 = vmatpush1.msra.mxu0 0.0
  %642 = vmatprep.subr.mxu0 0.0
  %643 = vmatpush1.msra.mxu0 0.0
  %644 = vmatprep.subr.mxu0 0.0
  %645 = vmatpush1.msra.mxu0 0.0
  %646 = vmatprep.subr.mxu0 0.0
  %647 = vmatpush1.msra.mxu0 0.0
  %648 = vmatprep.subr.mxu0 0.0
  %649 = vmatpush1.msra.mxu0 0.0
  %650 = vmatprep.subr.mxu0 0.0
  %651 = vmatpush1.msra.mxu0 0.0
  %652 = vmatprep.subr.mxu0 0.0
  %653 = vmatpush1.msra.mxu0 0.0
  %654 = vmatprep.subr.mxu0 0.0
  %655 = vmatpush1.msra.mxu0 0.0
  %656 = vmatprep.subr.mxu0 0.0
  %657 = vmatpush1.msra.mxu0 0.0
  %658 = vmatprep.subr.mxu0 0.0
  %659 = vmatpush1.msra.mxu0 0.0
  %660 = vmatprep.subr.mxu0 0.0
  %661 = vmatpush1.msra.mxu0 0.0
  %662 = vmatprep.subr.mxu0 0.0
  %663 = vmatpush1.msra.mxu0 0.0
  %664 = vmatprep.subr.mxu0 0.0
  %665 = vmatpush1.msra.mxu0 0.0
  %666 = vmatprep.subr.mxu0 0.0
  %667 = vmatpush1.msra.mxu0 0.0
  %668 = vmatprep.subr.mxu0 0.0
  %669 = vmatpush1.msra.mxu0 0.0
  %670 = vmatprep.subr.mxu0 0.0
  %671 = vmatpush1.msra.mxu0 0.0
  %672 = vmatprep.subr.mxu0 0.0
  %673 = vmatpush1.msra.mxu0 0.0
  %674 = vmatprep.subr.mxu0 0.0
  %675 = vmatpush1.msra.mxu0 0.0
  %676 = vmatprep.subr.mxu0 0.0
  %677 = vmatpush1.msra.mxu0 0.0
  %678 = vmatprep.subr.mxu0 0.0
  %679 = vmatpush1.msra.mxu0 0.0
  %680 = vmatprep.mubr.f32.mxu0 0.0
  %681 = vmatmul.mubr.f32.gmra.mrb[0].mxu0 %v614
  %v682 = vpop.f32.mrb[0].mxu0
  %v683 = vadd.f32 0.0, %v682
  %v684 = vpop.f32.mrb[0].mxu0
  %685 = vdwg.mxu0
  %v686 = vadd.f32 %v608, %v683
  %v687 = vpack.c.bf16 %v686, %v686
  %s688 = scalar_lea.vmem %s3, 4
  %689 = vst.msk [vmem:[%s688] sm:$0xf] %vm354, %v687
  %v690 = vsel %vm48, %v686, 0.0
  %691 = vadd.xlane.f32.xlu0 %v690
  %v692 = vpop.xlane.xlu0 %691
  %v693 = vmul.f32 %v686, %v686
  %v694 = vsel %vm48, %v693, 0.0
  %695 = vadd.xlane.f32.xlu0 %v694
  %v696 = vpop.xlane.xlu0 %695
  %v697 = vsel %vm37, %v692, %v696
  %v698 = vadd.f32 %v364, %v697
  %vm699 = vcmask 15360
  %700 = vst.msk [vmem:[%s4] sm:$0xff] %vm699, %v698
  // Predicated region
  $region14: #{residual_block.4} parent=0 // pred_check
    _
  $region15: #{residual_block.4} parent=0 // pred_check_branch
    %702 = sbr.rel (0) target = $region17
  $region16: #{residual_block.4} parent=0 // pred_region
    _
  $region17: #{residual_block.4} parent=0 // pred_fallthru
    _
  // Predicated region
  $region18: #{residual_block.4} parent=0 // pred_check
    _
  $region19: #{residual_block.4} parent=0 // pred_check_branch
    %704 = sbr.rel (0) target = $region21
  $region20: #{residual_block.4} parent=0 // pred_region
    _
  $region21: #{residual_block.4} parent=0 // pred_fallthru
    _
  // Predicated region
  $region22: #{residual_block.4} parent=0 // pred_check
    _
  $region23: #{residual_block.4} parent=0 // pred_check_branch
    %706 = sbr.rel (0) target = $region25
  $region24: #{residual_block.4} parent=0 // pred_region
    _
  $region25: #{residual_block.4} parent=0 // pred_fallthru
    _
  // Predicated region
  $region26: #{residual_block.4} parent=0 // pred_check
    _
  $region27: #{residual_block.4} parent=0 // pred_check_branch
    %708 = sbr.rel (0) target = $region29
  $region28: #{residual_block.4} parent=0 // pred_region
    _
  $region29: #{residual_block.4} parent=0 // pred_fallthru
    _

</llo_original>
